<compile_context>
chip_gen: v7x
topology: tpu7x:2x2x1
jax: 0.10.0
libtpu: 0.0.40
codegen_flags: <defaults>
</compile_context>

<pallas_src>
import functools

import jax
import jax.numpy as jnp
from jax import lax
from jax.experimental import pallas as pl
from jax.experimental.pallas import tpu as pltpu


# ----------------------------------------------------------------------------
# Pallas kernel: one grid step == `time_block` timesteps for one batch block,
# processed layer-major.
# ----------------------------------------------------------------------------
def _gru_kernel(num_layers, time_block, n_time_blocks, seq_len, mm_dtype,
                h0_ref, x_ref, wx_ref, wh_ref, wn_ref, bx_ref,
                out_ref, hT_ref, h_scratch, gx_scratch, slab_scratch):
    t_blk = pl.program_id(1)                 # time-block index (serial axis)
    hp = h_scratch.shape[-1]                 # padded hidden (multiple of 128)
    bb = h_scratch.shape[1]                  # padded batch block (multiple of 8)
    mask_tail = (time_block * n_time_blocks) != seq_len   # static

    # Initialize the recurrent state at the start of each batch block's sequence.
    @pl.when(t_blk == 0)
    def _():
        h_scratch[...] = h0_ref[...].astype(h_scratch.dtype)

    for layer in range(num_layers):          # small, unrolled
        # --- Batched x-side gate matmul for the whole time block (one MXU op,
        # --- M = Tb*Bb) plus one bias broadcast per layer per block.
        inp = x_ref[...] if layer == 0 else slab_scratch[...]
        gx = (jnp.dot(inp.reshape(time_block * bb, hp).astype(mm_dtype),
                      wx_ref[layer], preferred_element_type=jnp.float32)
              + bx_ref[layer])
        gx_scratch[...] = gx.reshape(time_block, bb, 3 * hp)

        # Intermediate layers feed the next layer via the slab; the top layer
        # writes the output tile directly.
        dst = out_ref if layer == num_layers - 1 else slab_scratch

        # --- Serial recurrence over the block; h carried in vregs.
        def step(i, h):
            gxi = gx_scratch[i]                                      # (Bb, 3Hp)
            gh = jnp.dot(h.astype(mm_dtype), wh_ref[layer],
                         preferred_element_type=jnp.float32)         # (Bb, 2Hp)
            z = jax.nn.sigmoid(gxi[:, :hp] + gh[:, :hp])
            r = jax.nn.sigmoid(gxi[:, hp:2 * hp] + gh[:, hp:])
            n = jnp.tanh(gxi[:, 2 * hp:]
                         + jnp.dot((r * h).astype(mm_dtype), wn_ref[layer],
                                   preferred_element_type=jnp.float32))
            h_new = (1.0 - z) * n + z * h
            if mask_tail:                                            # padded tail steps hold state
                valid = (t_blk * time_block + i) < seq_len
                h_new = jnp.where(valid, h_new, h)
            dst[i] = h_new.astype(dst.dtype)
            return h_new

        h_scratch[layer] = lax.fori_loop(0, time_block, step, h_scratch[layer])

    # Final hidden state after the last (valid) timestep.
    @pl.when(t_blk == n_time_blocks - 1)
    def _():
        hT_ref[...] = h_scratch[...].astype(hT_ref.dtype)


# ----------------------------------------------------------------------------
# Wrapper: hoisted projection, weight fusion, padding, pallas_call plumbing.
# ----------------------------------------------------------------------------
def _round_up(x, m):
    return (x + m - 1) // m * m


def _vmem_cap_bytes():
    # Query physical VMEM and leave 25% headroom for compiler-internal scratch.
    try:
        phys = int(pltpu.get_tpu_info().vmem_capacity_bytes)
    except Exception:
        phys = 64 * 2**20            # conservative default (v7x per-core VMEM)
    return max(32 * 2**20, phys * 3 // 4)


def custom_gru_forward(params, x, h0=None, *, time_block=32, batch_block=None,
                       matmul_dtype=jnp.bfloat16):
    """x: (batch, seq, input_size) [batch_first=True]. Returns (outputs, h_T).

    matmul_dtype=jnp.bfloat16 (default): bf16 MXU operands + bf16 HBM activation
    storage, f32 accumulation and f32 recurrent state.  Use jnp.float32 for a
    bit-faithful (multi-pass MXU) path.
    NOTE: bf16 rounding of the recurrent state compounds with sequence length;
    prefer the f32 path for very long sequences if tight accuracy is required.
    """
    w_in, b_in, wz, bz, wr, br, wn, bn = params
    B, S, _ = x.shape
    L, two_h, H = wz.shape
    assert two_h == 2 * H

    if h0 is None:
        h0 = jnp.zeros((L, B, H), jnp.float32)

    io_dtype = jnp.bfloat16 if matmul_dtype == jnp.bfloat16 else jnp.float32

    # Pad to TPU-native tiling: sublane = 8 (batch), lane = 128 (hidden).
    Bp = _round_up(B, 8)
    Hp = _round_up(H, 128)
    Tb = max(1, min(time_block, S))
    Sp = _round_up(S, Tb)
    # Keep the batch unsplit by default (MXU M-dim of the serial h-side matmuls).
    # Pass batch_block=Bp//2 (Bp >= 16) to feed v7x's two TensorCores.
    Bb = Bp if batch_block is None else _round_up(min(batch_block, Bp), 8)
    if Bp % Bb:
        Bb = Bp
    nb, nt = Bp // Bb, Sp // Tb

    # Hoisted, time-invariant input projection, produced directly time-major.
    xp = jnp.einsum("bsi,ih->sbh", x.astype(jnp.float32), w_in) + b_in   # (S, B, H)
    xp = jnp.pad(xp.astype(io_dtype), ((0, Sp - S), (0, Bp - B), (0, Hp - H)))
    h0p = jnp.pad(h0.astype(jnp.float32), ((0, 0), (0, Bp - B), (0, Hp - H)))

    # Split each (L, 2H, H) gate weight: cat([x, h]) @ W == x @ W[:H] + h @ W[H:],
    # zero-pad to (Hp, Hp), and fuse across gates along the output dim.
    pad_w = lambda w: jnp.pad(w, ((0, 0), (0, Hp - H), (0, Hp - H)))
    pad_b = lambda b: jnp.pad(b, ((0, 0), (0, Hp - H)))
    wx_cat = jnp.concatenate([pad_w(wz[:, :H]), pad_w(wr[:, :H]), pad_w(wn[:, :H])],
                             axis=-1).astype(matmul_dtype)               # (L, Hp, 3Hp)
    wh_cat = jnp.concatenate([pad_w(wz[:, H:]), pad_w(wr[:, H:])],
                             axis=-1).astype(matmul_dtype)               # (L, Hp, 2Hp)
    wnh = pad_w(wn[:, H:]).astype(matmul_dtype)                          # (L, Hp, Hp)
    bx_cat = jnp.concatenate([pad_b(bz), pad_b(br), pad_b(bn)],
                             axis=-1).reshape(L, 1, 3 * Hp).astype(jnp.float32)

    time_map = lambda b, t: (t, b, 0)
    batch_map = lambda b, t: (0, b, 0)
    w_map = lambda b, t: (0, 0, 0)

    # TODO(synk): on newer jax, time-invariant weights could request
    # pipeline_mode=pl.Buffered(1) to avoid the double-buffered weight copy.
    in_specs = [
        pl.BlockSpec((L, Bb, Hp), batch_map),        # h0
        pl.BlockSpec((Tb, Bb, Hp), time_map),        # projected inputs (time-major)
        pl.BlockSpec((L, Hp, 3 * Hp), w_map),        # fused x-side gate weights
        pl.BlockSpec((L, Hp, 2 * Hp), w_map),        # fused h-side (z, r) weights
        pl.BlockSpec((L, Hp, Hp), w_map),            # n-gate h-side weight
        pl.BlockSpec((L, 1, 3 * Hp), w_map),         # fused gate biases
    ]
    out_specs = (
        pl.BlockSpec((Tb, Bb, Hp), time_map),        # outputs (Sp, Bp, Hp)
        pl.BlockSpec((L, Bb, Hp), batch_map),        # final hidden state
    )

    io_bytes = jnp.dtype(io_dtype).itemsize
    wbytes = int((wx_cat.size + wh_cat.size + wnh.size) * jnp.dtype(matmul_dtype).itemsize
                 + bx_cat.size * 4)
    # Double-buffered weights + double-buffered x/out tiles + h0/hT tiles + scratch.
    vmem_need = (2 * wbytes
                 + 2 * 2 * Tb * Bb * Hp * io_bytes
                 + 2 * 2 * L * Bb * Hp * 4
                 + (L * Bb * Hp + Tb * Bb * 4 * Hp) * 4)
    vmem_limit = int(min(_vmem_cap_bytes(), max(32 * 2**20, 2 * vmem_need)))

    cost = pl.CostEstimate(
        flops=int(2 * Sp * L * Bp * Hp * 6 * Hp),
        transcendentals=int(3 * Sp * L * Bp * Hp),
        bytes_accessed=int(wbytes + io_bytes * 2 * Sp * Bp * Hp + 4 * 2 * L * Bp * Hp))

    kernel = functools.partial(_gru_kernel, L, Tb, nt, S, matmul_dtype)
    out_shape = (jax.ShapeDtypeStruct((Sp, Bp, Hp), io_dtype),
                 jax.ShapeDtypeStruct((L, Bp, Hp), jnp.float32))

    out_tm, h_T = pl.pallas_call(
        kernel,
        out_shape=out_shape,
        grid_spec=pltpu.PrefetchScalarGridSpec(
            num_scalar_prefetch=0,
            grid=(nb, nt),                   # batch-parallel outer, serial time inner
            in_specs=in_specs,
            out_specs=out_specs,
            scratch_shapes=[
                pltpu.VMEM((L, Bb, Hp), jnp.float32),       # recurrent state
                pltpu.VMEM((Tb, Bb, 3 * Hp), jnp.float32),  # per-layer gx slab
                pltpu.VMEM((Tb, Bb, Hp), jnp.float32),      # inter-layer activations
            ]),
        cost_estimate=cost,
        compiler_params=pltpu.CompilerParams(
            dimension_semantics=("parallel", "arbitrary"),
            vmem_limit_bytes=vmem_limit),
    )(h0p, xp, wx_cat, wh_cat, wnh, bx_cat)

    # Slice off padding; return batch-first like the PyTorch module.
    outputs = jnp.transpose(out_tm[:S, :B, :H], (1, 0, 2))               # (B, S, H)
    return outputs, h_T[:, :B, :H]


# ----------------------------------------------------------------------------
# Deterministic parameter init (matches the nn.Module shapes; synthetic values).
# ----------------------------------------------------------------------------
def init_params(key, input_size, hidden_size, num_layers):
    H, I, L = hidden_size, input_size, num_layers
    ks = jax.random.split(key, 8)

    def unif(k, shape, fan_in):
        bound = 1.0 / jnp.sqrt(fan_in)
        return jax.random.uniform(k, shape, jnp.float32, -bound, bound)

    w_in = unif(ks[0], (I, H), I)            # input_layer weight (transposed)
    b_in = unif(ks[1], (H,), I)
    wz = unif(ks[2], (L, 2 * H, H), 2 * H)   # update gate weights (transposed)
    bz = unif(ks[3], (L, H), 2 * H)
    wr = unif(ks[4], (L, 2 * H, H), 2 * H)   # reset gate
    br = unif(ks[5], (L, H), 2 * H)
    wn = unif(ks[6], (L, 2 * H, H), 2 * H)   # new gate
    bn = unif(ks[7], (L, H), 2 * H)
    return (w_in, b_in, wz, bz, wr, br, wn, bn)


# ----------------------------------------------------------------------------
# Pure-JAX reference (mirrors the PyTorch forward exactly) for verification.
# ----------------------------------------------------------------------------
def gru_reference(params, x, h0):
    w_in, b_in, wz, bz, wr, br, wn, bn = params
    B, S, _ = x.shape
    L, _, H = h0.shape
    xp = x @ w_in + b_in
    h = h0
    outs = []
    for t in range(S):
        x_t = xp[:, t]
        h_next = []
        for l in range(L):
            h_prev = h[l]
            comb = jnp.concatenate([x_t, h_prev], axis=1)
            z = jax.nn.sigmoid(comb @ wz[l] + bz[l])
            r = jax.nn.sigmoid(comb @ wr[l] + br[l])
            n = jnp.tanh(jnp.concatenate([x_t, r * h_prev], axis=1) @ wn[l] + bn[l])
            hn = (1.0 - z) * n + z * h_prev
            h_next.append(hn)
            x_t = hn
        h = jnp.stack(h_next)
        outs.append(h[-1])
    return jnp.stack(outs, axis=1), h


if __name__ == "__main__":
    batch, seq_len, input_size, hidden_size, num_layers = 4, 12, 16, 32, 2

    key = jax.random.PRNGKey(0)
    k_par, k_x = jax.random.split(key)
    params = init_params(k_par, input_size, hidden_size, num_layers)
    x = jax.random.normal(k_x, (batch, seq_len, input_size), jnp.float32)

    h0 = jnp.zeros((num_layers, batch, hidden_size), jnp.float32)
    ref_out, ref_h = gru_reference(params, x, h0)

    # f32 matmul path: tight check against the PyTorch-equivalent reference.
    out_f32, h_f32 = custom_gru_forward(params, x, matmul_dtype=jnp.float32)
    out_f32, h_f32 = jax.block_until_ready((out_f32, h_f32))
    assert out_f32.shape == (batch, seq_len, hidden_size)
    assert h_f32.shape == (num_layers, batch, hidden_size)
    assert jnp.allclose(out_f32, ref_out, rtol=1e-4, atol=1e-4)
    assert jnp.allclose(h_f32, ref_h, rtol=1e-4, atol=1e-4)

    # Default bf16 MXU path (f32 accumulation, f32 recurrent state): loose
    # tolerance by design — bf16 rounding compounds with sequence length, and
    # the f32 path above is the tight correctness gate.
    out_bf, h_bf = custom_gru_forward(params, x)
    out_bf, h_bf = jax.block_until_ready((out_bf, h_bf))
    assert jnp.allclose(out_bf.astype(jnp.float32), ref_out, rtol=1e-1, atol=1e-1)
    assert jnp.allclose(h_bf, ref_h, rtol=1e-1, atol=1e-1)

    print("KERNEL_OK")
</pallas_src>

<mosaic_0001>
module attributes {stable_mosaic.version = 11 : i64} {
  func.func @_gru_kernel(%arg0: i32, %arg1: i32, %arg2: memref<2x8x128xf32, #tpu.memory_space<vmem>>, %arg3: memref<12x8x128xf32, #tpu.memory_space<vmem>>, %arg4: memref<2x128x384xf32, #tpu.memory_space<vmem>>, %arg5: memref<2x128x256xf32, #tpu.memory_space<vmem>>, %arg6: memref<2x128x128xf32, #tpu.memory_space<vmem>>, %arg7: memref<2x1x384xf32, #tpu.memory_space<vmem>>, %arg8: memref<12x8x128xf32, #tpu.memory_space<vmem>>, %arg9: memref<2x8x128xf32, #tpu.memory_space<vmem>>, %arg10: memref<2x8x128xf32, #tpu.memory_space<vmem>>, %arg11: memref<12x8x384xf32, #tpu.memory_space<vmem>>, %arg12: memref<12x8x128xf32, #tpu.memory_space<vmem>>) attributes {dimension_semantics = [#tpu.dimension_semantics<parallel>, #tpu.dimension_semantics<arbitrary>], iteration_bounds = array<i64: 1, 1>, scalar_prefetch = 0 : i64, scratch_operands = 3 : i64, tpu.core_type = #tpu.core_type<tc>, window_params = [{transform_indices = @transform_0, window_bounds = array<i64: 2, 8, 128>}, {transform_indices = @transform_1, window_bounds = array<i64: 12, 8, 128>}, {pipeline_mode = #tpu.pipeline_mode<synchronous>, transform_indices = @transform_2, window_bounds = array<i64: 2, 128, 384>}, {pipeline_mode = #tpu.pipeline_mode<synchronous>, transform_indices = @transform_3, window_bounds = array<i64: 2, 128, 256>}, {pipeline_mode = #tpu.pipeline_mode<synchronous>, transform_indices = @transform_4, window_bounds = array<i64: 2, 128, 128>}, {pipeline_mode = #tpu.pipeline_mode<synchronous>, transform_indices = @transform_5, window_bounds = array<i64: 2, 1, 384>}, {transform_indices = @transform_6, window_bounds = array<i64: 12, 8, 128>}, {transform_indices = @transform_7, window_bounds = array<i64: 2, 8, 128>}]} {
    %c0_i32 = arith.constant 0 : i32
    %0 = arith.cmpi eq, %arg1, %c0_i32 : i32
    %1 = arith.extui %0 : i1 to i32
    %c0_i32_0 = arith.constant 0 : i32
    %2 = arith.cmpi ne, %1, %c0_i32_0 : i32
    scf.if %2 {
      %c0_44 = arith.constant 0 : index
      %c0_45 = arith.constant 0 : index
      %c0_46 = arith.constant 0 : index
      %42 = vector.load %arg2[%c0_44, %c0_45, %c0_46] : memref<2x8x128xf32, #tpu.memory_space<vmem>>, vector<2x8x128xf32>
      %c0_47 = arith.constant 0 : index
      %c0_48 = arith.constant 0 : index
      %c0_49 = arith.constant 0 : index
      %43 = vector.load %arg10[%c0_47, %c0_48, %c0_49] : memref<2x8x128xf32, #tpu.memory_space<vmem>>, vector<2x8x128xf32>
      tpu.vector_store %arg10[%c0_47, %c0_48, %c0_49], %42 {strides = array<i32>} : memref<2x8x128xf32, #tpu.memory_space<vmem>>, vector<2x8x128xf32>,
    } else {
    }
    %c0 = arith.constant 0 : index
    %c0_1 = arith.constant 0 : index
    %c0_2 = arith.constant 0 : index
    %3 = vector.load %arg3[%c0, %c0_1, %c0_2] : memref<12x8x128xf32, #tpu.memory_space<vmem>>, vector<12x8x128xf32>
    %4 = vector.shape_cast %3 : vector<12x8x128xf32> to vector<96x128xf32>
    %c0_3 = arith.constant 0 : index
    %c0_4 = arith.constant 0 : index
    %c0_5 = arith.constant 0 : index
    %5 = vector.load %arg4[%c0_3, %c0_4, %c0_5] : memref<2x128x384xf32, #tpu.memory_space<vmem>>, vector<1x128x384xf32>
    %6 = vector.shape_cast %5 : vector<1x128x384xf32> to vector<128x384xf32>
    %cst = arith.constant dense<0.000000e+00> : vector<96x384xf32>
    %7 = tpu.matmul %4, %6, %cst {dimension_numbers = #tpu.dot_dimension_numbers<[1], [0], [0], [1], [0, 0, 1, 1], [], []>} : vector<96x128xf32>, vector<128x384xf32>, vector<96x384xf32> -> vector<96x384xf32>
    %c0_6 = arith.constant 0 : index
    %c0_7 = arith.constant 0 : index
    %c0_8 = arith.constant 0 : index
    %8 = vector.load %arg7[%c0_6, %c0_7, %c0_8] : memref<2x1x384xf32, #tpu.memory_space<vmem>>, vector<1x1x384xf32>
    %9 = vector.shape_cast %8 : vector<1x1x384xf32> to vector<1x384xf32>
    %10 = vector.broadcast %9 : vector<1x384xf32> to vector<96x384xf32>
    %11 = arith.addf %7, %10 : vector<96x384xf32>
    %12 = vector.shape_cast %11 : vector<96x384xf32> to vector<12x8x384xf32>
    %c0_9 = arith.constant 0 : index
    %c0_10 = arith.constant 0 : index
    %c0_11 = arith.constant 0 : index
    %13 = vector.load %arg11[%c0_9, %c0_10, %c0_11] : memref<12x8x384xf32, #tpu.memory_space<vmem>>, vector<12x8x384xf32>
    tpu.vector_store %arg11[%c0_9, %c0_10, %c0_11], %12 {strides = array<i32>} : memref<12x8x384xf32, #tpu.memory_space<vmem>>, vector<12x8x384xf32>,
    %c0_12 = arith.constant 0 : index
    %c0_13 = arith.constant 0 : index
    %c0_14 = arith.constant 0 : index
    %14 = vector.load %arg10[%c0_12, %c0_13, %c0_14] : memref<2x8x128xf32, #tpu.memory_space<vmem>>, vector<1x8x128xf32>
    %15 = vector.shape_cast %14 : vector<1x8x128xf32> to vector<8x128xf32>
    %c0_i32_15 = arith.constant 0 : i32
    %c12_i32 = arith.constant 12 : i32
    %16 = arith.addi %c0_i32_15, %c12_i32 : i32
    %c1_i32 = arith.constant 1 : i32
    %17 = scf.for %arg13 = %c0_i32_15 to %16 step %c1_i32 iter_args(%arg14 = %15) -> (vector<8x128xf32>)  : i32 {
      %42 = arith.index_cast %arg13 : i32 to index
      %c0_44 = arith.constant 0 : index
      %c0_45 = arith.constant 0 : index
      %43 = vector.load %arg11[%42, %c0_44, %c0_45] : memref<12x8x384xf32, #tpu.memory_space<vmem>>, vector<1x8x384xf32>
      %44 = vector.shape_cast %43 : vector<1x8x384xf32> to vector<8x384xf32>
      %c0_46 = arith.constant 0 : index
      %c0_47 = arith.constant 0 : index
      %c0_48 = arith.constant 0 : index
      %45 = vector.load %arg5[%c0_46, %c0_47, %c0_48] : memref<2x128x256xf32, #tpu.memory_space<vmem>>, vector<1x128x256xf32>
      %46 = vector.shape_cast %45 : vector<1x128x256xf32> to vector<128x256xf32>
      %cst_49 = arith.constant dense<0.000000e+00> : vector<8x256xf32>
      %47 = tpu.matmul %arg14, %46, %cst_49 {dimension_numbers = #tpu.dot_dimension_numbers<[1], [0], [0], [1], [0, 0, 1, 1], [], []>} : vector<8x128xf32>, vector<128x256xf32>, vector<8x256xf32> -> vector<8x256xf32>
      %48 = vector.extract_strided_slice %44 {offsets = [0, 0], sizes = [8, 128], strides = [1, 1]} : vector<8x384xf32> to vector<8x128xf32>
      %49 = vector.extract_strided_slice %47 {offsets = [0, 0], sizes = [8, 128], strides = [1, 1]} : vector<8x256xf32> to vector<8x128xf32>
      %50 = arith.addf %48, %49 : vector<8x128xf32>
      %51 = arith.negf %50 : vector<8x128xf32>
      %52 = math.exp %51 : vector<8x128xf32>
      %cst_50 = arith.constant 1.000000e+00 : f32
      %53 = vector.broadcast %cst_50 : f32 to vector<8x128xf32>
      %54 = arith.addf %53, %52 : vector<8x128xf32>
      %55 = arith.divf %53, %54 : vector<8x128xf32>
      %56 = vector.extract_strided_slice %44 {offsets = [0, 128], sizes = [8, 128], strides = [1, 1]} : vector<8x384xf32> to vector<8x128xf32>
      %57 = vector.extract_strided_slice %47 {offsets = [0, 128], sizes = [8, 128], strides = [1, 1]} : vector<8x256xf32> to vector<8x128xf32>
      %58 = arith.addf %56, %57 : vector<8x128xf32>
      %59 = arith.negf %58 : vector<8x128xf32>
      %60 = math.exp %59 : vector<8x128xf32>
      %cst_51 = arith.constant 1.000000e+00 : f32
      %61 = vector.broadcast %cst_51 : f32 to vector<8x128xf32>
      %62 = arith.addf %61, %60 : vector<8x128xf32>
      %63 = arith.divf %61, %62 : vector<8x128xf32>
      %64 = vector.extract_strided_slice %44 {offsets = [0, 256], sizes = [8, 128], strides = [1, 1]} : vector<8x384xf32> to vector<8x128xf32>
      %65 = arith.mulf %63, %arg14 : vector<8x128xf32>
      %c0_52 = arith.constant 0 : index
      %c0_53 = arith.constant 0 : index
      %c0_54 = arith.constant 0 : index
      %66 = vector.load %arg6[%c0_52, %c0_53, %c0_54] : memref<2x128x128xf32, #tpu.memory_space<vmem>>, vector<1x128x128xf32>
      %67 = vector.shape_cast %66 : vector<1x128x128xf32> to vector<128x128xf32>
      %cst_55 = arith.constant dense<0.000000e+00> : vector<8x128xf32>
      %68 = tpu.matmul %65, %67, %cst_55 {dimension_numbers = #tpu.dot_dimension_numbers<[1], [0], [0], [1], [0, 0, 1, 1], [], []>} : vector<8x128xf32>, vector<128x128xf32>, vector<8x128xf32> -> vector<8x128xf32>
      %69 = arith.addf %64, %68 : vector<8x128xf32>
      %70 = math.tanh %69 : vector<8x128xf32>
      %cst_56 = arith.constant 1.000000e+00 : f32
      %71 = vector.broadcast %cst_56 : f32 to vector<8x128xf32>
      %72 = arith.subf %71, %55 : vector<8x128xf32>
      %73 = arith.mulf %72, %70 : vector<8x128xf32>
      %74 = arith.mulf %55, %arg14 : vector<8x128xf32>
      %75 = arith.addf %73, %74 : vector<8x128xf32>
      %76 = arith.index_cast %arg13 : i32 to index
      %c0_57 = arith.constant 0 : index
      %c0_58 = arith.constant 0 : index
      %77 = vector.load %arg12[%76, %c0_57, %c0_58] : memref<12x8x128xf32, #tpu.memory_space<vmem>>, vector<1x8x128xf32>
      %78 = vector.shape_cast %77 : vector<1x8x128xf32> to vector<8x128xf32>
      %79 = vector.shape_cast %75 : vector<8x128xf32> to vector<1x8x128xf32>
      tpu.vector_store %arg12[%76, %c0_57, %c0_58], %79 {strides = array<i32>} : memref<12x8x128xf32, #tpu.memory_space<vmem>>, vector<1x8x128xf32>,
      scf.yield %75 : vector<8x128xf32>
    }
    %c12_i32_16 = arith.constant 12 : i32
    %c0_17 = arith.constant 0 : index
    %c0_18 = arith.constant 0 : index
    %c0_19 = arith.constant 0 : index
    %18 = vector.load %arg10[%c0_17, %c0_18, %c0_19] : memref<2x8x128xf32, #tpu.memory_space<vmem>>, vector<1x8x128xf32>
    %19 = vector.shape_cast %18 : vector<1x8x128xf32> to vector<8x128xf32>
    %20 = vector.shape_cast %17 : vector<8x128xf32> to vector<1x8x128xf32>
    tpu.vector_store %arg10[%c0_17, %c0_18, %c0_19], %20 {strides = array<i32>} : memref<2x8x128xf32, #tpu.memory_space<vmem>>, vector<1x8x128xf32>,
    %c0_20 = arith.constant 0 : index
    %c0_21 = arith.constant 0 : index
    %c0_22 = arith.constant 0 : index
    %21 = vector.load %arg12[%c0_20, %c0_21, %c0_22] : memref<12x8x128xf32, #tpu.memory_space<vmem>>, vector<12x8x128xf32>
    %22 = vector.shape_cast %21 : vector<12x8x128xf32> to vector<96x128xf32>
    %c1 = arith.constant 1 : index
    %c0_23 = arith.constant 0 : index
    %c0_24 = arith.constant 0 : index
    %23 = vector.load %arg4[%c1, %c0_23, %c0_24] : memref<2x128x384xf32, #tpu.memory_space<vmem>>, vector<1x128x384xf32>
    %24 = vector.shape_cast %23 : vector<1x128x384xf32> to vector<128x384xf32>
    %cst_25 = arith.constant dense<0.000000e+00> : vector<96x384xf32>
    %25 = tpu.matmul %22, %24, %cst_25 {dimension_numbers = #tpu.dot_dimension_numbers<[1], [0], [0], [1], [0, 0, 1, 1], [], []>} : vector<96x128xf32>, vector<128x384xf32>, vector<96x384xf32> -> vector<96x384xf32>
    %c1_26 = arith.constant 1 : index
    %c0_27 = arith.constant 0 : index
    %c0_28 = arith.constant 0 : index
    %26 = vector.load %arg7[%c1_26, %c0_27, %c0_28] : memref<2x1x384xf32, #tpu.memory_space<vmem>>, vector<1x1x384xf32>
    %27 = vector.shape_cast %26 : vector<1x1x384xf32> to vector<1x384xf32>
    %28 = vector.broadcast %27 : vector<1x384xf32> to vector<96x384xf32>
    %29 = arith.addf %25, %28 : vector<96x384xf32>
    %30 = vector.shape_cast %29 : vector<96x384xf32> to vector<12x8x384xf32>
    %c0_29 = arith.constant 0 : index
    %c0_30 = arith.constant 0 : index
    %c0_31 = arith.constant 0 : index
    %31 = vector.load %arg11[%c0_29, %c0_30, %c0_31] : memref<12x8x384xf32, #tpu.memory_space<vmem>>, vector<12x8x384xf32>
    tpu.vector_store %arg11[%c0_29, %c0_30, %c0_31], %30 {strides = array<i32>} : memref<12x8x384xf32, #tpu.memory_space<vmem>>, vector<12x8x384xf32>,
    %c1_32 = arith.constant 1 : index
    %c0_33 = arith.constant 0 : index
    %c0_34 = arith.constant 0 : index
    %32 = vector.load %arg10[%c1_32, %c0_33, %c0_34] : memref<2x8x128xf32, #tpu.memory_space<vmem>>, vector<1x8x128xf32>
    %33 = vector.shape_cast %32 : vector<1x8x128xf32> to vector<8x128xf32>
    %c0_i32_35 = arith.constant 0 : i32
    %c12_i32_36 = arith.constant 12 : i32
    %34 = arith.addi %c0_i32_35, %c12_i32_36 : i32
    %c1_i32_37 = arith.constant 1 : i32
    %35 = scf.for %arg13 = %c0_i32_35 to %34 step %c1_i32_37 iter_args(%arg14 = %33) -> (vector<8x128xf32>)  : i32 {
      %42 = arith.index_cast %arg13 : i32 to index
      %c0_44 = arith.constant 0 : index
      %c0_45 = arith.constant 0 : index
      %43 = vector.load %arg11[%42, %c0_44, %c0_45] : memref<12x8x384xf32, #tpu.memory_space<vmem>>, vector<1x8x384xf32>
      %44 = vector.shape_cast %43 : vector<1x8x384xf32> to vector<8x384xf32>
      %c1_46 = arith.constant 1 : index
      %c0_47 = arith.constant 0 : index
      %c0_48 = arith.constant 0 : index
      %45 = vector.load %arg5[%c1_46, %c0_47, %c0_48] : memref<2x128x256xf32, #tpu.memory_space<vmem>>, vector<1x128x256xf32>
      %46 = vector.shape_cast %45 : vector<1x128x256xf32> to vector<128x256xf32>
      %cst_49 = arith.constant dense<0.000000e+00> : vector<8x256xf32>
      %47 = tpu.matmul %arg14, %46, %cst_49 {dimension_numbers = #tpu.dot_dimension_numbers<[1], [0], [0], [1], [0, 0, 1, 1], [], []>} : vector<8x128xf32>, vector<128x256xf32>, vector<8x256xf32> -> vector<8x256xf32>
      %48 = vector.extract_strided_slice %44 {offsets = [0, 0], sizes = [8, 128], strides = [1, 1]} : vector<8x384xf32> to vector<8x128xf32>
      %49 = vector.extract_strided_slice %47 {offsets = [0, 0], sizes = [8, 128], strides = [1, 1]} : vector<8x256xf32> to vector<8x128xf32>
      %50 = arith.addf %48, %49 : vector<8x128xf32>
      %51 = arith.negf %50 : vector<8x128xf32>
      %52 = math.exp %51 : vector<8x128xf32>
      %cst_50 = arith.constant 1.000000e+00 : f32
      %53 = vector.broadcast %cst_50 : f32 to vector<8x128xf32>
      %54 = arith.addf %53, %52 : vector<8x128xf32>
      %55 = arith.divf %53, %54 : vector<8x128xf32>
      %56 = vector.extract_strided_slice %44 {offsets = [0, 128], sizes = [8, 128], strides = [1, 1]} : vector<8x384xf32> to vector<8x128xf32>
      %57 = vector.extract_strided_slice %47 {offsets = [0, 128], sizes = [8, 128], strides = [1, 1]} : vector<8x256xf32> to vector<8x128xf32>
      %58 = arith.addf %56, %57 : vector<8x128xf32>
      %59 = arith.negf %58 : vector<8x128xf32>
      %60 = math.exp %59 : vector<8x128xf32>
      %cst_51 = arith.constant 1.000000e+00 : f32
      %61 = vector.broadcast %cst_51 : f32 to vector<8x128xf32>
      %62 = arith.addf %61, %60 : vector<8x128xf32>
      %63 = arith.divf %61, %62 : vector<8x128xf32>
      %64 = vector.extract_strided_slice %44 {offsets = [0, 256], sizes = [8, 128], strides = [1, 1]} : vector<8x384xf32> to vector<8x128xf32>
      %65 = arith.mulf %63, %arg14 : vector<8x128xf32>
      %c1_52 = arith.constant 1 : index
      %c0_53 = arith.constant 0 : index
      %c0_54 = arith.constant 0 : index
      %66 = vector.load %arg6[%c1_52, %c0_53, %c0_54] : memref<2x128x128xf32, #tpu.memory_space<vmem>>, vector<1x128x128xf32>
      %67 = vector.shape_cast %66 : vector<1x128x128xf32> to vector<128x128xf32>
      %cst_55 = arith.constant dense<0.000000e+00> : vector<8x128xf32>
      %68 = tpu.matmul %65, %67, %cst_55 {dimension_numbers = #tpu.dot_dimension_numbers<[1], [0], [0], [1], [0, 0, 1, 1], [], []>} : vector<8x128xf32>, vector<128x128xf32>, vector<8x128xf32> -> vector<8x128xf32>
      %69 = arith.addf %64, %68 : vector<8x128xf32>
      %70 = math.tanh %69 : vector<8x128xf32>
      %cst_56 = arith.constant 1.000000e+00 : f32
      %71 = vector.broadcast %cst_56 : f32 to vector<8x128xf32>
      %72 = arith.subf %71, %55 : vector<8x128xf32>
      %73 = arith.mulf %72, %70 : vector<8x128xf32>
      %74 = arith.mulf %55, %arg14 : vector<8x128xf32>
      %75 = arith.addf %73, %74 : vector<8x128xf32>
      %76 = arith.index_cast %arg13 : i32 to index
      %c0_57 = arith.constant 0 : index
      %c0_58 = arith.constant 0 : index
      %77 = vector.load %arg8[%76, %c0_57, %c0_58] : memref<12x8x128xf32, #tpu.memory_space<vmem>>, vector<1x8x128xf32>
      %78 = vector.shape_cast %77 : vector<1x8x128xf32> to vector<8x128xf32>
      %79 = vector.shape_cast %75 : vector<8x128xf32> to vector<1x8x128xf32>
      tpu.vector_store %arg8[%76, %c0_57, %c0_58], %79 {strides = array<i32>} : memref<12x8x128xf32, #tpu.memory_space<vmem>>, vector<1x8x128xf32>,
      scf.yield %75 : vector<8x128xf32>
    }
    %c12_i32_38 = arith.constant 12 : i32
    %c1_39 = arith.constant 1 : index
    %c0_40 = arith.constant 0 : index
    %c0_41 = arith.constant 0 : index
    %36 = vector.load %arg10[%c1_39, %c0_40, %c0_41] : memref<2x8x128xf32, #tpu.memory_space<vmem>>, vector<1x8x128xf32>
    %37 = vector.shape_cast %36 : vector<1x8x128xf32> to vector<8x128xf32>
    %38 = vector.shape_cast %35 : vector<8x128xf32> to vector<1x8x128xf32>
    tpu.vector_store %arg10[%c1_39, %c0_40, %c0_41], %38 {strides = array<i32>} : memref<2x8x128xf32, #tpu.memory_space<vmem>>, vector<1x8x128xf32>,
    %c0_i32_42 = arith.constant 0 : i32
    %39 = arith.cmpi eq, %arg1, %c0_i32_42 : i32
    %40 = arith.extui %39 : i1 to i32
    %c0_i32_43 = arith.constant 0 : i32
    %41 = arith.cmpi ne, %40, %c0_i32_43 : i32
    scf.if %41 {
      %c0_44 = arith.constant 0 : index
      %c0_45 = arith.constant 0 : index
      %c0_46 = arith.constant 0 : index
      %42 = vector.load %arg10[%c0_44, %c0_45, %c0_46] : memref<2x8x128xf32, #tpu.memory_space<vmem>>, vector<2x8x128xf32>
      %c0_47 = arith.constant 0 : index
      %c0_48 = arith.constant 0 : index
      %c0_49 = arith.constant 0 : index
      %43 = vector.load %arg9[%c0_47, %c0_48, %c0_49] : memref<2x8x128xf32, #tpu.memory_space<vmem>>, vector<2x8x128xf32>
      tpu.vector_store %arg9[%c0_47, %c0_48, %c0_49], %42 {strides = array<i32>} : memref<2x8x128xf32, #tpu.memory_space<vmem>>, vector<2x8x128xf32>,
    } else {
    }
    return
  }
  func.func @transform_0(%arg0: i32, %arg1: i32) -> (i32, i32, i32) {
    %c0_i32 = arith.constant 0 : i32
    %c0_i32_0 = arith.constant 0 : i32
    %c0_i32_1 = arith.constant 0 : i32
    return %c0_i32, %arg0, %c0_i32_0 : i32, i32, i32
  }
  func.func @transform_1(%arg0: i32, %arg1: i32) -> (i32, i32, i32) {
    %c0_i32 = arith.constant 0 : i32
    %c0_i32_0 = arith.constant 0 : i32
    return %arg1, %arg0, %c0_i32 : i32, i32, i32
  }
  func.func @transform_2(%arg0: i32, %arg1: i32) -> (i32, i32, i32) {
    %c0_i32 = arith.constant 0 : i32
    %c0_i32_0 = arith.constant 0 : i32
    %c0_i32_1 = arith.constant 0 : i32
    %c0_i32_2 = arith.constant 0 : i32
    return %c0_i32, %c0_i32_0, %c0_i32_1 : i32, i32, i32
  }
  func.func @transform_3(%arg0: i32, %arg1: i32) -> (i32, i32, i32) {
    %c0_i32 = arith.constant 0 : i32
    %c0_i32_0 = arith.constant 0 : i32
    %c0_i32_1 = arith.constant 0 : i32
    %c0_i32_2 = arith.constant 0 : i32
    return %c0_i32, %c0_i32_0, %c0_i32_1 : i32, i32, i32
  }
  func.func @transform_4(%arg0: i32, %arg1: i32) -> (i32, i32, i32) {
    %c0_i32 = arith.constant 0 : i32
    %c0_i32_0 = arith.constant 0 : i32
    %c0_i32_1 = arith.constant 0 : i32
    %c0_i32_2 = arith.constant 0 : i32
    return %c0_i32, %c0_i32_0, %c0_i32_1 : i32, i32, i32
  }
  func.func @transform_5(%arg0: i32, %arg1: i32) -> (i32, i32, i32) {
    %c0_i32 = arith.constant 0 : i32
    %c0_i32_0 = arith.constant 0 : i32
    %c0_i32_1 = arith.constant 0 : i32
    %c0_i32_2 = arith.constant 0 : i32
    return %c0_i32, %c0_i32_0, %c0_i32_1 : i32, i32, i32
  }
  func.func @transform_6(%arg0: i32, %arg1: i32) -> (i32, i32, i32) {
    %c0_i32 = arith.constant 0 : i32
    %c0_i32_0 = arith.constant 0 : i32
    return %arg1, %arg0, %c0_i32 : i32, i32, i32
  }
  func.func @transform_7(%arg0: i32, %arg1: i32) -> (i32, i32, i32) {
    %c0_i32 = arith.constant 0 : i32
    %c0_i32_0 = arith.constant 0 : i32
    %c0_i32_1 = arith.constant 0 : i32
    return %c0_i32, %arg0, %c0_i32_0 : i32, i32, i32
  }
}

</mosaic_0001>

<llo_original>
// kernel: tpu_custom_call.1
$region0: #{tpu_custom_call.1}
  #allocation0 [shape = 'u32[]', space=smem, size = 0x4, offset = 0x4, fixed_abs, tag = 'smem constant byte address 0x4 - core index']
  #allocation1 [shape = 'u32[144,128]{1,0:T(1,128)}', space=vmem, size = 0x12000, scoped, tag = 'internal scratch']
  #allocation2 [shape = 'f32[2,8,128]{2,1,0:T(8,128)}', space=vmem, size = 0x2000, scoped, tag = 'scratch operand']
  #allocation3 [shape = 'f32[12,8,384]{2,1,0:T(8,128)}', space=vmem, size = 0x24000, scoped, tag = 'scratch operand']
  #allocation4 [shape = 'f32[12,8,128]{2,1,0:T(8,128)}', space=vmem, size = 0xc000, scoped, tag = 'scratch operand']
  %s0 = inlined_call_operand.hbm [shape: f32[2,8,128], index: 0, kind: input, shape index: {}]
  %s1 = inlined_call_operand.hbm [shape: f32[12,8,128], index: 1, kind: input, shape index: {}]
  %s2 = inlined_call_operand.hbm [shape: f32[2,128,384], index: 2, kind: input, shape index: {}]
  %s3 = inlined_call_operand.hbm [shape: f32[2,128,256], index: 3, kind: input, shape index: {}]
  %s4 = inlined_call_operand.hbm [shape: f32[2,128,128], index: 4, kind: input, shape index: {}]
  %s5 = inlined_call_operand.vmem [shape: f32[2,1,384], index: 5, kind: input, shape index: {}]
  %s6 = inlined_call_operand.hbm [shape: f32[12,8,128], index: 6, kind: output, shape index: {0}]
  %s7 = inlined_call_operand.hbm [shape: f32[2,8,128], index: 7, kind: output, shape index: {1}]
  %8 = xla_tuple %s6, %s7
  %s9 = sld [smem:[#allocation0]]
  $region84: #{tpu_custom_call.1} parent=0
    _
  %s11 = ssub.s32 1, %s9
  %s12 = scalar_select 0, %s11, %s9
  $region1: #{tpu_custom_call.1} parent=0
    #allocation5 [shape = 'u8[8192]{0}', space=vmem, size = 0x2000, scoped, tag = 'input window, operand 0, single buffered']
    #allocation6 [shape = 's32[1]{0}', space=sflag, size = 0x4, scoped, tag = 'scoped memory for tpu_custom_call.1']
    #allocation7 [shape = 's32[1]{0}', space=sflag, size = 0x4, scoped, tag = 'scoped memory for tpu_custom_call.1']
    #allocation8 [shape = 'u8[49152]{0}', space=vmem, size = 0xc000, scoped, tag = 'input window, operand 1, single buffered']
    #allocation9 [shape = 's32[1]{0}', space=sflag, size = 0x4, scoped, tag = 'scoped memory for tpu_custom_call.1']
    #allocation10 [shape = 'u8[393216]{0}', space=vmem, size = 0x60000, scoped, tag = 'input window, operand 2, single buffered']
    #allocation11 [shape = 'u8[262144]{0}', space=vmem, size = 0x40000, scoped, tag = 'input window, operand 3, single buffered']
    #allocation12 [shape = 's32[1]{0}', space=sflag, size = 0x4, scoped, tag = 'scoped memory for tpu_custom_call.1']
    #allocation13 [shape = 'u8[131072]{0}', space=vmem, size = 0x20000, scoped, tag = 'input window, operand 4, single buffered']
    #allocation14 [shape = 'u8[49152]{0}', space=vmem, size = 0xc000, scoped, tag = 'output window, operand 0, single buffered']
    #allocation15 [shape = 'u8[8192]{0}', space=vmem, size = 0x2000, scoped, tag = 'output window, operand 1, single buffered']
    #allocation16 [shape = 's32[1]{0}', space=sflag, size = 0x4, scoped, tag = 'scoped memory for tpu_custom_call.1']
    %13 = vsyncpa [#allocation6], 0
    %14 = vsyncpa [#allocation9], 0
    %15 = vsyncpa [#allocation12], 0
    %16 = vsyncpa [#allocation7], 0
    %17 = vsyncpa [#allocation16], 0
    // Predicated region
    $region2: #{tpu_custom_call.1} parent=1 // pred_check
      _
    $region3: #{tpu_custom_call.1} parent=1 // pred_check_branch
      %19 = sbr.rel (0) target = $region5
    $region4: #{tpu_custom_call.1} parent=1 // pred_region
      %s21 = ssub.s32 256, 256
      %22 = vsyncadd [#allocation6], %s21
      %s23 = sshll.u32 [#allocation5], 4
      %s24 = int_to_ptr.vmem [resolvable:$true] %s23
      %29 = dma.hbm_to_vmem [thread:$0]  %s0, 256, %s24, [#allocation6], 128, 128, 8
    $region5: #{tpu_custom_call.1} parent=1 // pred_fallthru
      _
    // Predicated region
    $region6: #{tpu_custom_call.1} parent=1 // pred_check
      _
    $region7: #{tpu_custom_call.1} parent=1 // pred_check_branch
      %31 = sbr.rel (0) target = $region9
    $region8: #{tpu_custom_call.1} parent=1 // pred_region
      %s33 = ssub.s32 1536, 1536
      %34 = vsyncadd [#allocation9], %s33
      %s35 = sshll.u32 [#allocation8], 4
      %s36 = int_to_ptr.vmem [resolvable:$true] %s35
      %41 = dma.hbm_to_vmem [thread:$0]  %s1, 1536, %s36, [#allocation9], 128, 128, 8
    $region9: #{tpu_custom_call.1} parent=1 // pred_fallthru
      _
    // Predicated region
    $region10: #{tpu_custom_call.1} parent=1 // pred_check
      _
    $region11: #{tpu_custom_call.1} parent=1 // pred_check_branch
      %43 = sbr.rel (0) target = $region13
    $region12: #{tpu_custom_call.1} parent=1 // pred_region
      %s45 = ssub.s32 12288, 12288
      %46 = vsyncadd [#allocation9], %s45
      %s47 = sshll.u32 [#allocation10], 4
      %s48 = int_to_ptr.vmem [resolvable:$true] %s47
      %53 = dma.hbm_to_vmem [thread:$0]  %s2, 12288, %s48, [#allocation9], 384, 384, 24
    $region13: #{tpu_custom_call.1} parent=1 // pred_fallthru
      _
    // Predicated region
    $region14: #{tpu_custom_call.1} parent=1 // pred_check
      _
    $region15: #{tpu_custom_call.1} parent=1 // pred_check_branch
      %55 = sbr.rel (0) target = $region17
    $region16: #{tpu_custom_call.1} parent=1 // pred_region
      %s57 = ssub.s32 8192, 8192
      %58 = vsyncadd [#allocation12], %s57
      %s59 = sshll.u32 [#allocation11], 4
      %s60 = int_to_ptr.vmem [resolvable:$true] %s59
      %65 = dma.hbm_to_vmem [thread:$0]  %s3, 8192, %s60, [#allocation12], 256, 256, 16
    $region17: #{tpu_custom_call.1} parent=1 // pred_fallthru
      _
    // Predicated region
    $region18: #{tpu_custom_call.1} parent=1 // pred_check
      _
    $region19: #{tpu_custom_call.1} parent=1 // pred_check_branch
      %67 = sbr.rel (0) target = $region21
    $region20: #{tpu_custom_call.1} parent=1 // pred_region
      %s69 = ssub.s32 4096, 4096
      %70 = vsyncadd [#allocation12], %s69
      %s71 = sshll.u32 [#allocation13], 4
      %s72 = int_to_ptr.vmem [resolvable:$true] %s71
      %77 = dma.hbm_to_vmem [thread:$0]  %s4, 4096, %s72, [#allocation12], 128, 128, 8
    $region21: #{tpu_custom_call.1} parent=1 // pred_fallthru
      _
    // Predicated region
    $region22: #{tpu_custom_call.1} parent=1 // pred_check
      _
    $region23: #{tpu_custom_call.1} parent=1 // pred_check_branch
      %79 = sbr.rel (0) target = $region25
    $region24: #{tpu_custom_call.1} parent=1 // pred_region
      _
    $region25: #{tpu_custom_call.1} parent=1 // pred_fallthru
      _
    // Predicated region
    $region26: #{tpu_custom_call.1} parent=1 // pred_check
      _
    $region27: #{tpu_custom_call.1} parent=1 // pred_check_branch
      %81 = sbr.rel (0) target = $region29
    $region28: #{tpu_custom_call.1} parent=1 // pred_region
      %82 = dma.done [#allocation6], 256
    $region29: #{tpu_custom_call.1} parent=1 // pred_fallthru
      _
    // Predicated region
    $region30: #{tpu_custom_call.1} parent=1 // pred_check
      _
    $region31: #{tpu_custom_call.1} parent=1 // pred_check_branch
      %84 = sbr.rel (0) target = $region33
    $region32: #{tpu_custom_call.1} parent=1 // pred_region
      %85 = dma.done [#allocation9], 1536
    $region33: #{tpu_custom_call.1} parent=1 // pred_fallthru
      _
    // Predicated region
    $region34: #{tpu_custom_call.1} parent=1 // pred_check
      _
    $region35: #{tpu_custom_call.1} parent=1 // pred_check_branch
      %87 = sbr.rel (0) target = $region37
    $region36: #{tpu_custom_call.1} parent=1 // pred_region
      %88 = dma.done [#allocation9], 12288
    $region37: #{tpu_custom_call.1} parent=1 // pred_fallthru
      _
    // Predicated region
    $region38: #{tpu_custom_call.1} parent=1 // pred_check
      _
    $region39: #{tpu_custom_call.1} parent=1 // pred_check_branch
      %90 = sbr.rel (0) target = $region41
    $region40: #{tpu_custom_call.1} parent=1 // pred_region
      %91 = dma.done [#allocation12], 8192
    $region41: #{tpu_custom_call.1} parent=1 // pred_fallthru
      _
    // Predicated region
    $region42: #{tpu_custom_call.1} parent=1 // pred_check
      _
    $region43: #{tpu_custom_call.1} parent=1 // pred_check_branch
      %93 = sbr.rel (0) target = $region45
    $region44: #{tpu_custom_call.1} parent=1 // pred_region
      %94 = dma.done [#allocation12], 4096
    $region45: #{tpu_custom_call.1} parent=1 // pred_fallthru
      _
    %p95 = scmp.eq.s32.totalorder 0, 0
    // Predicated region
    $region46: #{tpu_custom_call.1} parent=1 // pred_check
      %p96 = pneg %p95
    $region47: #{tpu_custom_call.1} parent=1 // pred_check_branch
      %98 = sbr.rel (%p96) target = $region49
    $region48: #{tpu_custom_call.1} parent=1 // pred_region
      %v99 = vld [vmem:[#allocation5] sm:$0xff]
      %v100 = vld [vmem:[#allocation5 + $0x8] sm:$0xff]
      %101 = vst [vmem:[#allocation2] sm:$0xff] %v99
      %102 = vst [vmem:[#allocation2 + $0x8] sm:$0xff] %v100
    $region49: #{tpu_custom_call.1} parent=1 // pred_fallthru
      _
    %v103 = vld [vmem:[#allocation8] sm:$0xff]
    %v104 = vld [vmem:[#allocation8 + $0x8] sm:$0xff]
    %v105 = vld [vmem:[#allocation8 + $0x10] sm:$0xff]
    %v106 = vld [vmem:[#allocation8 + $0x18] sm:$0xff]
    %v107 = vld [vmem:[#allocation8 + $0x20] sm:$0xff]
    %v108 = vld [vmem:[#allocation8 + $0x28] sm:$0xff]
    %v109 = vld [vmem:[#allocation8 + $0x30] sm:$0xff]
    %v110 = vld [vmem:[#allocation8 + $0x38] sm:$0xff]
    %v111 = vld [vmem:[#allocation8 + $0x40] sm:$0xff]
    %v112 = vld [vmem:[#allocation8 + $0x48] sm:$0xff]
    %v113 = vld [vmem:[#allocation8 + $0x50] sm:$0xff]
    %v114 = vld [vmem:[#allocation8 + $0x58] sm:$0xff]
    %v115 = vld [vmem:[#allocation10] sm:$0xff]
    %v116 = vld [vmem:[#allocation10 + $0x8] sm:$0xff]
    %v117 = vld [vmem:[#allocation10 + $0x10] sm:$0xff]
    %v118 = vld [vmem:[#allocation10 + $0x18] sm:$0xff]
    %v119 = vld [vmem:[#allocation10 + $0x20] sm:$0xff]
    %v120 = vld [vmem:[#allocation10 + $0x28] sm:$0xff]
    %v121 = vld [vmem:[#allocation10 + $0x30] sm:$0xff]
    %v122 = vld [vmem:[#allocation10 + $0x38] sm:$0xff]
    %v123 = vld [vmem:[#allocation10 + $0x40] sm:$0xff]
    %v124 = vld [vmem:[#allocation10 + $0x48] sm:$0xff]
    %v125 = vld [vmem:[#allocation10 + $0x50] sm:$0xff]
    %v126 = vld [vmem:[#allocation10 + $0x58] sm:$0xff]
    %v127 = vld [vmem:[#allocation10 + $0x60] sm:$0xff]
    %v128 = vld [vmem:[#allocation10 + $0x68] sm:$0xff]
    %v129 = vld [vmem:[#allocation10 + $0x70] sm:$0xff]
    %v130 = vld [vmem:[#allocation10 + $0x78] sm:$0xff]
    %v131 = vld [vmem:[#allocation10 + $0x80] sm:$0xff]
    %v132 = vld [vmem:[#allocation10 + $0x88] sm:$0xff]
    %v133 = vld [vmem:[#allocation10 + $0x90] sm:$0xff]
    %v134 = vld [vmem:[#allocation10 + $0x98] sm:$0xff]
    %v135 = vld [vmem:[#allocation10 + $0xa0] sm:$0xff]
    %v136 = vld [vmem:[#allocation10 + $0xa8] sm:$0xff]
    %v137 = vld [vmem:[#allocation10 + $0xb0] sm:$0xff]
    %v138 = vld [vmem:[#allocation10 + $0xb8] sm:$0xff]
    %v139 = vld [vmem:[#allocation10 + $0xc0] sm:$0xff]
    %v140 = vld [vmem:[#allocation10 + $0xc8] sm:$0xff]
    %v141 = vld [vmem:[#allocation10 + $0xd0] sm:$0xff]
    %v142 = vld [vmem:[#allocation10 + $0xd8] sm:$0xff]
    %v143 = vld [vmem:[#allocation10 + $0xe0] sm:$0xff]
    %v144 = vld [vmem:[#allocation10 + $0xe8] sm:$0xff]
    %v145 = vld [vmem:[#allocation10 + $0xf0] sm:$0xff]
    %v146 = vld [vmem:[#allocation10 + $0xf8] sm:$0xff]
    %v147 = vld [vmem:[#allocation10 + $0x100] sm:$0xff]
    %v148 = vld [vmem:[#allocation10 + $0x108] sm:$0xff]
    %v149 = vld [vmem:[#allocation10 + $0x110] sm:$0xff]
    %v150 = vld [vmem:[#allocation10 + $0x118] sm:$0xff]
    %v151 = vld [vmem:[#allocation10 + $0x120] sm:$0xff]
    %v152 = vld [vmem:[#allocation10 + $0x128] sm:$0xff]
    %v153 = vld [vmem:[#allocation10 + $0x130] sm:$0xff]
    %v154 = vld [vmem:[#allocation10 + $0x138] sm:$0xff]
    %v155 = vld [vmem:[#allocation10 + $0x140] sm:$0xff]
    %v156 = vld [vmem:[#allocation10 + $0x148] sm:$0xff]
    %v157 = vld [vmem:[#allocation10 + $0x150] sm:$0xff]
    %v158 = vld [vmem:[#allocation10 + $0x158] sm:$0xff]
    %v159 = vld [vmem:[#allocation10 + $0x160] sm:$0xff]
    %v160 = vld [vmem:[#allocation10 + $0x168] sm:$0xff]
    %v161 = vld [vmem:[#allocation10 + $0x170] sm:$0xff]
    %v162 = vld [vmem:[#allocation10 + $0x178] sm:$0xff]
    %v163 = vld [vmem:[%s5] sm:$0x7]
    %v165 = vlaneseq
    %v166 = vshrl.u32 %v165, 7
    %v167 = vsub.s32 0, %v166
    %v168 = vrot.slane %v163, %v167
    %v169 = vlaneseq
    %v170 = vshrl.u32 %v169, 7
    %v171 = vsub.s32 1, %v170
    %v172 = vrot.slane %v163, %v171
    %v173 = vlaneseq
    %v174 = vshrl.u32 %v173, 7
    %v175 = vsub.s32 2, %v174
    %v176 = vrot.slane %v163, %v175
    %180 = vmatprep.subr.mxu0 %v116
    %181 = vmatpush1.msra.mxu0 %v115
    %182 = vmatprep.subr.mxu0 %v119
    %183 = vmatpush1.msra.mxu0 %v118
    %184 = vmatprep.subr.mxu0 %v122
    %185 = vmatpush1.msra.mxu0 %v121
    %186 = vmatprep.subr.mxu0 %v125
    %187 = vmatpush1.msra.mxu0 %v124
    %188 = vmatprep.subr.mxu0 %v128
    %189 = vmatpush1.msra.mxu0 %v127
    %190 = vmatprep.subr.mxu0 %v131
    %191 = vmatpush1.msra.mxu0 %v130
    %192 = vmatprep.subr.mxu0 %v134
    %193 = vmatpush1.msra.mxu0 %v133
    %194 = vmatprep.subr.mxu0 %v137
    %195 = vmatpush1.msra.mxu0 %v136
    %196 = vmatprep.subr.mxu0 %v140
    %197 = vmatpush1.msra.mxu0 %v139
    %198 = vmatprep.subr.mxu0 %v143
    %199 = vmatpush1.msra.mxu0 %v142
    %200 = vmatprep.subr.mxu0 %v146
    %201 = vmatpush1.msra.mxu0 %v145
    %202 = vmatprep.subr.mxu0 %v149
    %203 = vmatpush1.msra.mxu0 %v148
    %204 = vmatprep.subr.mxu0 %v152
    %205 = vmatpush1.msra.mxu0 %v151
    %206 = vmatprep.subr.mxu0 %v155
    %207 = vmatpush1.msra.mxu0 %v154
    %208 = vmatprep.subr.mxu0 %v158
    %209 = vmatpush1.msra.mxu0 %v157
    %210 = vmatprep.subr.mxu0 %v161
    %211 = vmatpush1.msra.mxu0 %v160
    %212 = vmatprep.subr.mxu0 0.0
    %213 = vmatpush1.msra.mxu0 0.0
    %214 = vmatprep.subr.mxu0 0.0
    %215 = vmatpush1.msra.mxu0 0.0
    %216 = vmatprep.subr.mxu0 0.0
    %217 = vmatpush1.msra.mxu0 0.0
    %218 = vmatprep.subr.mxu0 0.0
    %219 = vmatpush1.msra.mxu0 0.0
    %220 = vmatprep.subr.mxu0 0.0
    %221 = vmatpush1.msra.mxu0 0.0
    %222 = vmatprep.subr.mxu0 0.0
    %223 = vmatpush1.msra.mxu0 0.0
    %224 = vmatprep.subr.mxu0 0.0
    %225 = vmatpush1.msra.mxu0 0.0
    %226 = vmatprep.subr.mxu0 0.0
    %227 = vmatpush1.msra.mxu0 0.0
    %228 = vmatprep.subr.mxu0 0.0
    %229 = vmatpush1.msra.mxu0 0.0
    %230 = vmatprep.subr.mxu0 0.0
    %231 = vmatpush1.msra.mxu0 0.0
    %232 = vmatprep.subr.mxu0 0.0
    %233 = vmatpush1.msra.mxu0 0.0
    %234 = vmatprep.subr.mxu0 0.0
    %235 = vmatpush1.msra.mxu0 0.0
    %236 = vmatprep.subr.mxu0 0.0
    %237 = vmatpush1.msra.mxu0 0.0
    %238 = vmatprep.subr.mxu0 0.0
    %239 = vmatpush1.msra.mxu0 0.0
    %240 = vmatprep.subr.mxu0 0.0
    %241 = vmatpush1.msra.mxu0 0.0
    %242 = vmatprep.subr.mxu0 0.0
    %243 = vmatpush1.msra.mxu0 0.0
    %244 = vmatprep.mubr.f32.mxu0 0.0
    %245 = vmatmul.mubr.f32.gmra.mrb[0].mxu0 %v103
    %v246 = vpop.f32.mrb[0].mxu0
    %v247 = vadd.f32 %v168, %v246
    %v248 = vpop.f32.mrb[0].mxu0
    %v249 = vadd.f32 %v172, %v248
    %250 = vmatprep.mubr.f32.mxu0 0.0
    %251 = vmatmul.mubr.f32.gmra.mrb[0].mxu0 %v104
    %v252 = vpop.f32.mrb[0].mxu0
    %v253 = vadd.f32 %v168, %v252
    %v254 = vpop.f32.mrb[0].mxu0
    %v255 = vadd.f32 %v172, %v254
    %256 = vmatprep.mubr.f32.mxu0 0.0
    %257 = vmatmul.mubr.f32.gmra.mrb[0].mxu0 %v105
    %v258 = vpop.f32.mrb[0].mxu0
    %v259 = vadd.f32 %v168, %v258
    %v260 = vpop.f32.mrb[0].mxu0
    %v261 = vadd.f32 %v172, %v260
    %262 = vmatprep.mubr.f32.mxu0 0.0
    %263 = vmatmul.mubr.f32.gmra.mrb[0].mxu0 %v106
    %v264 = vpop.f32.mrb[0].mxu0
    %v265 = vadd.f32 %v168, %v264
    %v266 = vpop.f32.mrb[0].mxu0
    %v267 = vadd.f32 %v172, %v266
    %268 = vmatprep.mubr.f32.mxu0 0.0
    %269 = vmatmul.mubr.f32.gmra.mrb[0].mxu0 %v107
    %v270 = vpop.f32.mrb[0].mxu0
    %v271 = vadd.f32 %v168, %v270
    %v272 = vpop.f32.mrb[0].mxu0
    %v273 = vadd.f32 %v172, %v272
    %274 = vmatprep.mubr.f32.mxu0 0.0
    %275 = vmatmul.mubr.f32.gmra.mrb[0].mxu0 %v108
    %v276 = vpop.f32.mrb[0].mxu0
    %v277 = vadd.f32 %v168, %v276
    %v278 = vpop.f32.mrb[0].mxu0
    %v279 = vadd.f32 %v172, %v278
    %280 = vmatprep.mubr.f32.mxu0 0.0
    %281 = vmatmul.mubr.f32.gmra.mrb[0].mxu0 %v109
    %v282 = vpop.f32.mrb[0].mxu0
    %v283 = vadd.f32 %v168, %v282
    %v284 = vpop.f32.mrb[0].mxu0
    %v285 = vadd.f32 %v172, %v284
    %286 = vmatprep.mubr.f32.mxu0 0.0
    %287 = vmatmul.mubr.f32.gmra.mrb[0].mxu0 %v110
    %v288 = vpop.f32.mrb[0].mxu0
    %v289 = vadd.f32 %v168, %v288
    %v290 = vpop.f32.mrb[0].mxu0
    %v291 = vadd.f32 %v172, %v290
    %292 = vmatprep.mubr.f32.mxu0 0.0
    %293 = vmatmul.mubr.f32.gmra.mrb[0].mxu0 %v111
    %v294 = vpop.f32.mrb[0].mxu0
    %v295 = vadd.f32 %v168, %v294
    %v296 = vpop.f32.mrb[0].mxu0
    %v297 = vadd.f32 %v172, %v296
    %298 = vmatprep.mubr.f32.mxu0 0.0
    %299 = vmatmul.mubr.f32.gmra.mrb[0].mxu0 %v112
    %v300 = vpop.f32.mrb[0].mxu0
    %v301 = vadd.f32 %v168, %v300
    %v302 = vpop.f32.mrb[0].mxu0
    %v303 = vadd.f32 %v172, %v302
    %304 = vmatprep.mubr.f32.mxu0 0.0
    %305 = vmatmul.mubr.f32.gmra.mrb[0].mxu0 %v113
    %v306 = vpop.f32.mrb[0].mxu0
    %v307 = vadd.f32 %v168, %v306
    %v308 = vpop.f32.mrb[0].mxu0
    %v309 = vadd.f32 %v172, %v308
    %310 = vmatprep.mubr.f32.mxu0 0.0
    %311 = vmatmul.mubr.f32.gmra.mrb[0].mxu0 %v114
    %v312 = vpop.f32.mrb[0].mxu0
    %v313 = vadd.f32 %v168, %v312
    %v314 = vpop.f32.mrb[0].mxu0
    %v315 = vadd.f32 %v172, %v314
    %316 = vdwg.mxu0
    %317 = vmatprep.subr.mxu0 0.0
    %318 = vmatpush1.msra.mxu0 %v117
    %319 = vmatprep.subr.mxu0 0.0
    %320 = vmatpush1.msra.mxu0 %v120
    %321 = vmatprep.subr.mxu0 0.0
    %322 = vmatpush1.msra.mxu0 %v123
    %323 = vmatprep.subr.mxu0 0.0
    %324 = vmatpush1.msra.mxu0 %v126
    %325 = vmatprep.subr.mxu0 0.0
    %326 = vmatpush1.msra.mxu0 %v129
    %327 = vmatprep.subr.mxu0 0.0
    %328 = vmatpush1.msra.mxu0 %v132
    %329 = vmatprep.subr.mxu0 0.0
    %330 = vmatpush1.msra.mxu0 %v135
    %331 = vmatprep.subr.mxu0 0.0
    %332 = vmatpush1.msra.mxu0 %v138
    %333 = vmatprep.subr.mxu0 0.0
    %334 = vmatpush1.msra.mxu0 %v141
    %335 = vmatprep.subr.mxu0 0.0
    %336 = vmatpush1.msra.mxu0 %v144
    %337 = vmatprep.subr.mxu0 0.0
    %338 = vmatpush1.msra.mxu0 %v147
    %339 = vmatprep.subr.mxu0 0.0
    %340 = vmatpush1.msra.mxu0 %v150
    %341 = vmatprep.subr.mxu0 0.0
    %342 = vmatpush1.msra.mxu0 %v153
    %343 = vmatprep.subr.mxu0 0.0
    %344 = vmatpush1.msra.mxu0 %v156
    %345 = vmatprep.subr.mxu0 0.0
    %346 = vmatpush1.msra.mxu0 %v159
    %347 = vmatprep.subr.mxu0 0.0
    %348 = vmatpush1.msra.mxu0 %v162
    %349 = vmatprep.subr.mxu0 0.0
    %350 = vmatpush1.msra.mxu0 0.0
    %351 = vmatprep.subr.mxu0 0.0
    %352 = vmatpush1.msra.mxu0 0.0
    %353 = vmatprep.subr.mxu0 0.0
    %354 = vmatpush1.msra.mxu0 0.0
    %355 = vmatprep.subr.mxu0 0.0
    %356 = vmatpush1.msra.mxu0 0.0
    %357 = vmatprep.subr.mxu0 0.0
    %358 = vmatpush1.msra.mxu0 0.0
    %359 = vmatprep.subr.mxu0 0.0
    %360 = vmatpush1.msra.mxu0 0.0
    %361 = vmatprep.subr.mxu0 0.0
    %362 = vmatpush1.msra.mxu0 0.0
    %363 = vmatprep.subr.mxu0 0.0
    %364 = vmatpush1.msra.mxu0 0.0
    %365 = vmatprep.subr.mxu0 0.0
    %366 = vmatpush1.msra.mxu0 0.0
    %367 = vmatprep.subr.mxu0 0.0
    %368 = vmatpush1.msra.mxu0 0.0
    %369 = vmatprep.subr.mxu0 0.0
    %370 = vmatpush1.msra.mxu0 0.0
    %371 = vmatprep.subr.mxu0 0.0
    %372 = vmatpush1.msra.mxu0 0.0
    %373 = vmatprep.subr.mxu0 0.0
    %374 = vmatpush1.msra.mxu0 0.0
    %375 = vmatprep.subr.mxu0 0.0
    %376 = vmatpush1.msra.mxu0 0.0
    %377 = vmatprep.subr.mxu0 0.0
    %378 = vmatpush1.msra.mxu0 0.0
    %379 = vmatprep.subr.mxu0 0.0
    %380 = vmatpush1.msra.mxu0 0.0
    %381 = vmatprep.mubr.f32.mxu0 0.0
    %382 = vmatmul.mubr.f32.gmra.mrb[0].mxu0 %v103
    %v383 = vpop.f32.mrb[0].mxu0
    %v384 = vadd.f32 %v176, %v383
    %v385 = vpop.f32.mrb[0].mxu0
    %386 = vmatprep.mubr.f32.mxu0 0.0
    %387 = vmatmul.mubr.f32.gmra.mrb[0].mxu0 %v104
    %v388 = vpop.f32.mrb[0].mxu0
    %v389 = vadd.f32 %v176, %v388
    %v390 = vpop.f32.mrb[0].mxu0
    %391 = vmatprep.mubr.f32.mxu0 0.0
    %392 = vmatmul.mubr.f32.gmra.mrb[0].mxu0 %v105
    %v393 = vpop.f32.mrb[0].mxu0
    %v394 = vadd.f32 %v176, %v393
    %v395 = vpop.f32.mrb[0].mxu0
    %396 = vmatprep.mubr.f32.mxu0 0.0
    %397 = vmatmul.mubr.f32.gmra.mrb[0].mxu0 %v106
    %v398 = vpop.f32.mrb[0].mxu0
    %v399 = vadd.f32 %v176, %v398
    %v400 = vpop.f32.mrb[0].mxu0
    %401 = vmatprep.mubr.f32.mxu0 0.0
    %402 = vmatmul.mubr.f32.gmra.mrb[0].mxu0 %v107
    %v403 = vpop.f32.mrb[0].mxu0
    %v404 = vadd.f32 %v176, %v403
    %v405 = vpop.f32.mrb[0].mxu0
    %406 = vmatprep.mubr.f32.mxu0 0.0
    %407 = vmatmul.mubr.f32.gmra.mrb[0].mxu0 %v108
    %v408 = vpop.f32.mrb[0].mxu0
    %v409 = vadd.f32 %v176, %v408
    %v410 = vpop.f32.mrb[0].mxu0
    %411 = vmatprep.mubr.f32.mxu0 0.0
    %412 = vmatmul.mubr.f32.gmra.mrb[0].mxu0 %v109
    %v413 = vpop.f32.mrb[0].mxu0
    %v414 = vadd.f32 %v176, %v413
    %v415 = vpop.f32.mrb[0].mxu0
    %416 = vmatprep.mubr.f32.mxu0 0.0
    %417 = vmatmul.mubr.f32.gmra.mrb[0].mxu0 %v110
    %v418 = vpop.f32.mrb[0].mxu0
    %v419 = vadd.f32 %v176, %v418
    %v420 = vpop.f32.mrb[0].mxu0
    %421 = vmatprep.mubr.f32.mxu0 0.0
    %422 = vmatmul.mubr.f32.gmra.mrb[0].mxu0 %v111
    %v423 = vpop.f32.mrb[0].mxu0
    %v424 = vadd.f32 %v176, %v423
    %v425 = vpop.f32.mrb[0].mxu0
    %426 = vmatprep.mubr.f32.mxu0 0.0
    %427 = vmatmul.mubr.f32.gmra.mrb[0].mxu0 %v112
    %v428 = vpop.f32.mrb[0].mxu0
    %v429 = vadd.f32 %v176, %v428
    %v430 = vpop.f32.mrb[0].mxu0
    %431 = vmatprep.mubr.f32.mxu0 0.0
    %432 = vmatmul.mubr.f32.gmra.mrb[0].mxu0 %v113
    %v433 = vpop.f32.mrb[0].mxu0
    %v434 = vadd.f32 %v176, %v433
    %v435 = vpop.f32.mrb[0].mxu0
    %436 = vmatprep.mubr.f32.mxu0 0.0
    %437 = vmatmul.mubr.f32.gmra.mrb[0].mxu0 %v114
    %v438 = vpop.f32.mrb[0].mxu0
    %v439 = vadd.f32 %v176, %v438
    %v440 = vpop.f32.mrb[0].mxu0
    %441 = vdwg.mxu0
    %442 = vst [vmem:[#allocation3] sm:$0xff] %v247
    %443 = vst [vmem:[#allocation3 + $0x8] sm:$0xff] %v249
    %444 = vst [vmem:[#allocation3 + $0x10] sm:$0xff] %v384
    %445 = vst [vmem:[#allocation3 + $0x18] sm:$0xff] %v253
    %446 = vst [vmem:[#allocation3 + $0x20] sm:$0xff] %v255
    %447 = vst [vmem:[#allocation3 + $0x28] sm:$0xff] %v389
    %448 = vst [vmem:[#allocation3 + $0x30] sm:$0xff] %v259
    %449 = vst [vmem:[#allocation3 + $0x38] sm:$0xff] %v261
    %450 = vst [vmem:[#allocation3 + $0x40] sm:$0xff] %v394
    %451 = vst [vmem:[#allocation3 + $0x48] sm:$0xff] %v265
    %452 = vst [vmem:[#allocation3 + $0x50] sm:$0xff] %v267
    %453 = vst [vmem:[#allocation3 + $0x58] sm:$0xff] %v399
    %454 = vst [vmem:[#allocation3 + $0x60] sm:$0xff] %v271
    %455 = vst [vmem:[#allocation3 + $0x68] sm:$0xff] %v273
    %456 = vst [vmem:[#allocation3 + $0x70] sm:$0xff] %v404
    %457 = vst [vmem:[#allocation3 + $0x78] sm:$0xff] %v277
    %458 = vst [vmem:[#allocation3 + $0x80] sm:$0xff] %v279
    %459 = vst [vmem:[#allocation3 + $0x88] sm:$0xff] %v409
    %460 = vst [vmem:[#allocation3 + $0x90] sm:$0xff] %v283
    %461 = vst [vmem:[#allocation3 + $0x98] sm:$0xff] %v285
    %462 = vst [vmem:[#allocation3 + $0xa0] sm:$0xff] %v414
    %463 = vst [vmem:[#allocation3 + $0xa8] sm:$0xff] %v289
    %464 = vst [vmem:[#allocation3 + $0xb0] sm:$0xff] %v291
    %465 = vst [vmem:[#allocation3 + $0xb8] sm:$0xff] %v419
    %466 = vst [vmem:[#allocation3 + $0xc0] sm:$0xff] %v295
    %467 = vst [vmem:[#allocation3 + $0xc8] sm:$0xff] %v297
    %468 = vst [vmem:[#allocation3 + $0xd0] sm:$0xff] %v424
    %469 = vst [vmem:[#allocation3 + $0xd8] sm:$0xff] %v301
    %470 = vst [vmem:[#allocation3 + $0xe0] sm:$0xff] %v303
    %471 = vst [vmem:[#allocation3 + $0xe8] sm:$0xff] %v429
    %472 = vst [vmem:[#allocation3 + $0xf0] sm:$0xff] %v307
    %473 = vst [vmem:[#allocation3 + $0xf8] sm:$0xff] %v309
    %474 = vst [vmem:[#allocation3 + $0x100] sm:$0xff] %v434
    %475 = vst [vmem:[#allocation3 + $0x108] sm:$0xff] %v313
    %476 = vst [vmem:[#allocation3 + $0x110] sm:$0xff] %v315
    %477 = vst [vmem:[#allocation3 + $0x118] sm:$0xff] %v439
    %v478 = vld [vmem:[#allocation2] sm:$0xff]
    loop: start=0, step=1, limit=12
    $region50: #{tpu_custom_call.1} parent=1 // loop_pre_header
      _
    $region51: #{tpu_custom_call.1} parent=1 // loop_header
      %s480 = sphi 0, %s484
      %p481 = scmp.ge.s32.totalorder %s480, 12
      %v485 = vphi %v478, %v701
    $region52: #{tpu_custom_call.1} parent=1 // loop_header_branch
      %483 = sbr.rel (%p481) target = $region56
    $region53: #{tpu_custom_call.1} parent=1 // loop_body
      %s486 = smul.u32 %s480, 3
      %s487 = smul.addr %s486, 8
      %s488 = scalar_lea.vmem [#allocation3], %s487
      %v489 = vld [vmem:[%s488] sm:$0xff]
      %v490 = vld [vmem:[%s488 + $0x8] sm:$0xff]
      %v491 = vld [vmem:[%s488 + $0x10] sm:$0xff]
      %v492 = vld [vmem:[#allocation11] sm:$0xff]
      %v493 = vld [vmem:[#allocation11 + $0x8] sm:$0xff]
      %v494 = vld [vmem:[#allocation11 + $0x10] sm:$0xff]
      %v495 = vld [vmem:[#allocation11 + $0x18] sm:$0xff]
      %v496 = vld [vmem:[#allocation11 + $0x20] sm:$0xff]
      %v497 = vld [vmem:[#allocation11 + $0x28] sm:$0xff]
      %v498 = vld [vmem:[#allocation11 + $0x30] sm:$0xff]
      %v499 = vld [vmem:[#allocation11 + $0x38] sm:$0xff]
      %v500 = vld [vmem:[#allocation11 + $0x40] sm:$0xff]
      %v501 = vld [vmem:[#allocation11 + $0x48] sm:$0xff]
      %v502 = vld [vmem:[#allocation11 + $0x50] sm:$0xff]
      %v503 = vld [vmem:[#allocation11 + $0x58] sm:$0xff]
      %v504 = vld [vmem:[#allocation11 + $0x60] sm:$0xff]
      %v505 = vld [vmem:[#allocation11 + $0x68] sm:$0xff]
      %v506 = vld [vmem:[#allocation11 + $0x70] sm:$0xff]
      %v507 = vld [vmem:[#allocation11 + $0x78] sm:$0xff]
      %v508 = vld [vmem:[#allocation11 + $0x80] sm:$0xff]
      %v509 = vld [vmem:[#allocation11 + $0x88] sm:$0xff]
      %v510 = vld [vmem:[#allocation11 + $0x90] sm:$0xff]
      %v511 = vld [vmem:[#allocation11 + $0x98] sm:$0xff]
      %v512 = vld [vmem:[#allocation11 + $0xa0] sm:$0xff]
      %v513 = vld [vmem:[#allocation11 + $0xa8] sm:$0xff]
      %v514 = vld [vmem:[#allocation11 + $0xb0] sm:$0xff]
      %v515 = vld [vmem:[#allocation11 + $0xb8] sm:$0xff]
      %v516 = vld [vmem:[#allocation11 + $0xc0] sm:$0xff]
      %v517 = vld [vmem:[#allocation11 + $0xc8] sm:$0xff]
      %v518 = vld [vmem:[#allocation11 + $0xd0] sm:$0xff]
      %v519 = vld [vmem:[#allocation11 + $0xd8] sm:$0xff]
      %v520 = vld [vmem:[#allocation11 + $0xe0] sm:$0xff]
      %v521 = vld [vmem:[#allocation11 + $0xe8] sm:$0xff]
      %v522 = vld [vmem:[#allocation11 + $0xf0] sm:$0xff]
      %v523 = vld [vmem:[#allocation11 + $0xf8] sm:$0xff]
      %524 = vmatprep.subr.mxu0 %v493
      %525 = vmatpush1.msra.mxu0 %v492
      %526 = vmatprep.subr.mxu0 %v495
      %527 = vmatpush1.msra.mxu0 %v494
      %528 = vmatprep.subr.mxu0 %v497
      %529 = vmatpush1.msra.mxu0 %v496
      %530 = vmatprep.subr.mxu0 %v499
      %531 = vmatpush1.msra.mxu0 %v498
      %532 = vmatprep.subr.mxu0 %v501
      %533 = vmatpush1.msra.mxu0 %v500
      %534 = vmatprep.subr.mxu0 %v503
      %535 = vmatpush1.msra.mxu0 %v502
      %536 = vmatprep.subr.mxu0 %v505
      %537 = vmatpush1.msra.mxu0 %v504
      %538 = vmatprep.subr.mxu0 %v507
      %539 = vmatpush1.msra.mxu0 %v506
      %540 = vmatprep.subr.mxu0 %v509
      %541 = vmatpush1.msra.mxu0 %v508
      %542 = vmatprep.subr.mxu0 %v511
      %543 = vmatpush1.msra.mxu0 %v510
      %544 = vmatprep.subr.mxu0 %v513
      %545 = vmatpush1.msra.mxu0 %v512
      %546 = vmatprep.subr.mxu0 %v515
      %547 = vmatpush1.msra.mxu0 %v514
      %548 = vmatprep.subr.mxu0 %v517
      %549 = vmatpush1.msra.mxu0 %v516
      %550 = vmatprep.subr.mxu0 %v519
      %551 = vmatpush1.msra.mxu0 %v518
      %552 = vmatprep.subr.mxu0 %v521
      %553 = vmatpush1.msra.mxu0 %v520
      %554 = vmatprep.subr.mxu0 %v523
      %555 = vmatpush1.msra.mxu0 %v522
      %556 = vmatprep.subr.mxu0 0.0
      %557 = vmatpush1.msra.mxu0 0.0
      %558 = vmatprep.subr.mxu0 0.0
      %559 = vmatpush1.msra.mxu0 0.0
      %560 = vmatprep.subr.mxu0 0.0
      %561 = vmatpush1.msra.mxu0 0.0
      %562 = vmatprep.subr.mxu0 0.0
      %563 = vmatpush1.msra.mxu0 0.0
      %564 = vmatprep.subr.mxu0 0.0
      %565 = vmatpush1.msra.mxu0 0.0
      %566 = vmatprep.subr.mxu0 0.0
      %567 = vmatpush1.msra.mxu0 0.0
      %568 = vmatprep.subr.mxu0 0.0
      %569 = vmatpush1.msra.mxu0 0.0
      %570 = vmatprep.subr.mxu0 0.0
      %571 = vmatpush1.msra.mxu0 0.0
      %572 = vmatprep.subr.mxu0 0.0
      %573 = vmatpush1.msra.mxu0 0.0
      %574 = vmatprep.subr.mxu0 0.0
      %575 = vmatpush1.msra.mxu0 0.0
      %576 = vmatprep.subr.mxu0 0.0
      %577 = vmatpush1.msra.mxu0 0.0
      %578 = vmatprep.subr.mxu0 0.0
      %579 = vmatpush1.msra.mxu0 0.0
      %580 = vmatprep.subr.mxu0 0.0
      %581 = vmatpush1.msra.mxu0 0.0
      %582 = vmatprep.subr.mxu0 0.0
      %583 = vmatpush1.msra.mxu0 0.0
      %584 = vmatprep.subr.mxu0 0.0
      %585 = vmatpush1.msra.mxu0 0.0
      %586 = vmatprep.subr.mxu0 0.0
      %587 = vmatpush1.msra.mxu0 0.0
      %588 = vmatprep.mubr.f32.mxu0 0.0
      %589 = vmatmul.mubr.f32.gmra.mrb[0].mxu0 %v485
      %v590 = vpop.f32.mrb[0].mxu0
      %v591 = vadd.f32 0.0, %v590
      %v592 = vpop.f32.mrb[0].mxu0
      %v593 = vadd.f32 0.0, %v592
      %594 = vdwg.mxu0
      %v595 = vadd.f32 %v489, %v591
      %v596 = vxor.u32 %v595, 2147483648
      %v597 = vmul.f32 %v596, 1.442695
      %v598 = vpow.pop %v597
      %v599 = vadd.f32 %v598, 1.0
      %v600 = vrcp.pop %v599
      %v601 = vmul.f32 1.0, %v600
      %v602 = vadd.f32 %v490, %v593
      %v603 = vxor.u32 %v602, 2147483648
      %v604 = vmul.f32 %v603, 1.442695
      %v605 = vpow.pop %v604
      %v606 = vadd.f32 %v605, 1.0
      %v607 = vrcp.pop %v606
      %v608 = vmul.f32 1.0, %v607
      %v609 = vmul.f32 %v608, %v485
      %v610 = vld [vmem:[#allocation13] sm:$0xff]
      %v611 = vld [vmem:[#allocation13 + $0x8] sm:$0xff]
      %v612 = vld [vmem:[#allocation13 + $0x10] sm:$0xff]
      %v613 = vld [vmem:[#allocation13 + $0x18] sm:$0xff]
      %v614 = vld [vmem:[#allocation13 + $0x20] sm:$0xff]
      %v615 = vld [vmem:[#allocation13 + $0x28] sm:$0xff]
      %v616 = vld [vmem:[#allocation13 + $0x30] sm:$0xff]
      %v617 = vld [vmem:[#allocation13 + $0x38] sm:$0xff]
      %v618 = vld [vmem:[#allocation13 + $0x40] sm:$0xff]
      %v619 = vld [vmem:[#allocation13 + $0x48] sm:$0xff]
      %v620 = vld [vmem:[#allocation13 + $0x50] sm:$0xff]
      %v621 = vld [vmem:[#allocation13 + $0x58] sm:$0xff]
      %v622 = vld [vmem:[#allocation13 + $0x60] sm:$0xff]
      %v623 = vld [vmem:[#allocation13 + $0x68] sm:$0xff]
      %v624 = vld [vmem:[#allocation13 + $0x70] sm:$0xff]
      %v625 = vld [vmem:[#allocation13 + $0x78] sm:$0xff]
      %626 = vmatprep.subr.mxu0 0.0
      %627 = vmatpush1.msra.mxu0 %v610
      %628 = vmatprep.subr.mxu0 0.0
      %629 = vmatpush1.msra.mxu0 %v611
      %630 = vmatprep.subr.mxu0 0.0
      %631 = vmatpush1.msra.mxu0 %v612
      %632 = vmatprep.subr.mxu0 0.0
      %633 = vmatpush1.msra.mxu0 %v613
      %634 = vmatprep.subr.mxu0 0.0
      %635 = vmatpush1.msra.mxu0 %v614
      %636 = vmatprep.subr.mxu0 0.0
      %637 = vmatpush1.msra.mxu0 %v615
      %638 = vmatprep.subr.mxu0 0.0
      %639 = vmatpush1.msra.mxu0 %v616
      %640 = vmatprep.subr.mxu0 0.0
      %641 = vmatpush1.msra.mxu0 %v617
      %642 = vmatprep.subr.mxu0 0.0
      %643 = vmatpush1.msra.mxu0 %v618
      %644 = vmatprep.subr.mxu0 0.0
      %645 = vmatpush1.msra.mxu0 %v619
      %646 = vmatprep.subr.mxu0 0.0
      %647 = vmatpush1.msra.mxu0 %v620
      %648 = vmatprep.subr.mxu0 0.0
      %649 = vmatpush1.msra.mxu0 %v621
      %650 = vmatprep.subr.mxu0 0.0
      %651 = vmatpush1.msra.mxu0 %v622
      %652 = vmatprep.subr.mxu0 0.0
      %653 = vmatpush1.msra.mxu0 %v623
      %654 = vmatprep.subr.mxu0 0.0
      %655 = vmatpush1.msra.mxu0 %v624
      %656 = vmatprep.subr.mxu0 0.0
      %657 = vmatpush1.msra.mxu0 %v625
      %658 = vmatprep.subr.mxu0 0.0
      %659 = vmatpush1.msra.mxu0 0.0
      %660 = vmatprep.subr.mxu0 0.0
      %661 = vmatpush1.msra.mxu0 0.0
      %662 = vmatprep.subr.mxu0 0.0
      %663 = vmatpush1.msra.mxu0 0.0
      %664 = vmatprep.subr.mxu0 0.0
      %665 = vmatpush1.msra.mxu0 0.0
      %666 = vmatprep.subr.mxu0 0.0
      %667 = vmatpush1.msra.mxu0 0.0
      %668 = vmatprep.subr.mxu0 0.0
      %669 = vmatpush1.msra.mxu0 0.0
      %670 = vmatprep.subr.mxu0 0.0
      %671 = vmatpush1.msra.mxu0 0.0
      %672 = vmatprep.subr.mxu0 0.0
      %673 = vmatpush1.msra.mxu0 0.0
      %674 = vmatprep.subr.mxu0 0.0
      %675 = vmatpush1.msra.mxu0 0.0
      %676 = vmatprep.subr.mxu0 0.0
      %677 = vmatpush1.msra.mxu0 0.0
      %678 = vmatprep.subr.mxu0 0.0
      %679 = vmatpush1.msra.mxu0 0.0
      %680 = vmatprep.subr.mxu0 0.0
      %681 = vmatpush1.msra.mxu0 0.0
      %682 = vmatprep.subr.mxu0 0.0
      %683 = vmatpush1.msra.mxu0 0.0
      %684 = vmatprep.subr.mxu0 0.0
      %685 = vmatpush1.msra.mxu0 0.0
      %686 = vmatprep.subr.mxu0 0.0
      %687 = vmatpush1.msra.mxu0 0.0
      %688 = vmatprep.subr.mxu0 0.0
      %689 = vmatpush1.msra.mxu0 0.0
      %690 = vmatprep.mubr.f32.mxu0 0.0
      %691 = vmatmul.mubr.f32.gmra.mrb[0].mxu0 %v609
      %v692 = vpop.f32.mrb[0].mxu0
      %v693 = vadd.f32 0.0, %v692
      %v694 = vpop.f32.mrb[0].mxu0
      %695 = vdwg.mxu0
      %v696 = vadd.f32 %v491, %v693
      %v697 = vtanh.pop %v696
      %v698 = vsub.f32 1.0, %v601
      %v699 = vmul.f32 %v698, %v697
      %v700 = vmul.f32 %v601, %v485
      %v701 = vadd.f32 %v699, %v700
      %s702 = smul.u32 %s480, 8
      %s703 = scalar_lea.vmem [#allocation4], %s702
      %704 = vst [vmem:[%s703] sm:$0xff] %v701
    $region54: #{tpu_custom_call.1} parent=1 // loop_footer
      %s484 = sadd.s32 1, %s480
    $region55: #{tpu_custom_call.1} parent=1 // loop_footer_branch
      %479 = sbr.rel target = $region51
    $region56: #{tpu_custom_call.1} parent=1 // loop_exit
      _
    %705 = vst [vmem:[#allocation2] sm:$0xff] %v485
    %v706 = vld [vmem:[#allocation4] sm:$0xff]
    %v707 = vld [vmem:[#allocation4 + $0x8] sm:$0xff]
    %v708 = vld [vmem:[#allocation4 + $0x10] sm:$0xff]
    %v709 = vld [vmem:[#allocation4 + $0x18] sm:$0xff]
    %v710 = vld [vmem:[#allocation4 + $0x20] sm:$0xff]
    %v711 = vld [vmem:[#allocation4 + $0x28] sm:$0xff]
    %v712 = vld [vmem:[#allocation4 + $0x30] sm:$0xff]
    %v713 = vld [vmem:[#allocation4 + $0x38] sm:$0xff]
    %v714 = vld [vmem:[#allocation4 + $0x40] sm:$0xff]
    %v715 = vld [vmem:[#allocation4 + $0x48] sm:$0xff]
    %v716 = vld [vmem:[#allocation4 + $0x50] sm:$0xff]
    %v717 = vld [vmem:[#allocation4 + $0x58] sm:$0xff]
    %s718 = scalar_lea.vmem [#allocation10], 384
    %v719 = vld [vmem:[%s718] sm:$0xff]
    %v720 = vld [vmem:[%s718 + $0x8] sm:$0xff]
    %v721 = vld [vmem:[%s718 + $0x10] sm:$0xff]
    %v722 = vld [vmem:[%s718 + $0x18] sm:$0xff]
    %v723 = vld [vmem:[%s718 + $0x20] sm:$0xff]
    %v724 = vld [vmem:[%s718 + $0x28] sm:$0xff]
    %v725 = vld [vmem:[%s718 + $0x30] sm:$0xff]
    %v726 = vld [vmem:[%s718 + $0x38] sm:$0xff]
    %v727 = vld [vmem:[%s718 + $0x40] sm:$0xff]
    %v728 = vld [vmem:[%s718 + $0x48] sm:$0xff]
    %v729 = vld [vmem:[%s718 + $0x50] sm:$0xff]
    %v730 = vld [vmem:[%s718 + $0x58] sm:$0xff]
    %v731 = vld [vmem:[%s718 + $0x60] sm:$0xff]
    %v732 = vld [vmem:[%s718 + $0x68] sm:$0xff]
    %v733 = vld [vmem:[%s718 + $0x70] sm:$0xff]
    %v734 = vld [vmem:[%s718 + $0x78] sm:$0xff]
    %v735 = vld [vmem:[%s718 + $0x80] sm:$0xff]
    %v736 = vld [vmem:[%s718 + $0x88] sm:$0xff]
    %v737 = vld [vmem:[%s718 + $0x90] sm:$0xff]
    %v738 = vld [vmem:[%s718 + $0x98] sm:$0xff]
    %v739 = vld [vmem:[%s718 + $0xa0] sm:$0xff]
    %v740 = vld [vmem:[%s718 + $0xa8] sm:$0xff]
    %v741 = vld [vmem:[%s718 + $0xb0] sm:$0xff]
    %v742 = vld [vmem:[%s718 + $0xb8] sm:$0xff]
    %v743 = vld [vmem:[%s718 + $0xc0] sm:$0xff]
    %v744 = vld [vmem:[%s718 + $0xc8] sm:$0xff]
    %v745 = vld [vmem:[%s718 + $0xd0] sm:$0xff]
    %v746 = vld [vmem:[%s718 + $0xd8] sm:$0xff]
    %v747 = vld [vmem:[%s718 + $0xe0] sm:$0xff]
    %v748 = vld [vmem:[%s718 + $0xe8] sm:$0xff]
    %v749 = vld [vmem:[%s718 + $0xf0] sm:$0xff]
    %v750 = vld [vmem:[%s718 + $0xf8] sm:$0xff]
    %v751 = vld [vmem:[%s718 + $0x100] sm:$0xff]
    %v752 = vld [vmem:[%s718 + $0x108] sm:$0xff]
    %v753 = vld [vmem:[%s718 + $0x110] sm:$0xff]
    %v754 = vld [vmem:[%s718 + $0x118] sm:$0xff]
    %v755 = vld [vmem:[%s718 + $0x120] sm:$0xff]
    %v756 = vld [vmem:[%s718 + $0x128] sm:$0xff]
    %v757 = vld [vmem:[%s718 + $0x130] sm:$0xff]
    %v758 = vld [vmem:[%s718 + $0x138] sm:$0xff]
    %v759 = vld [vmem:[%s718 + $0x140] sm:$0xff]
    %v760 = vld [vmem:[%s718 + $0x148] sm:$0xff]
    %v761 = vld [vmem:[%s718 + $0x150] sm:$0xff]
    %v762 = vld [vmem:[%s718 + $0x158] sm:$0xff]
    %v763 = vld [vmem:[%s718 + $0x160] sm:$0xff]
    %v764 = vld [vmem:[%s718 + $0x168] sm:$0xff]
    %v765 = vld [vmem:[%s718 + $0x170] sm:$0xff]
    %v766 = vld [vmem:[%s718 + $0x178] sm:$0xff]
    %s767 = scalar_lea.vmem %s5, 3
    %v768 = vld [vmem:[%s767] sm:$0x7]
    %v770 = vlaneseq
    %v771 = vshrl.u32 %v770, 7
    %v772 = vsub.s32 0, %v771
    %v773 = vrot.slane %v768, %v772
    %v774 = vlaneseq
    %v775 = vshrl.u32 %v774, 7
    %v776 = vsub.s32 1, %v775
    %v777 = vrot.slane %v768, %v776
    %v778 = vlaneseq
    %v779 = vshrl.u32 %v778, 7
    %v780 = vsub.s32 2, %v779
    %v781 = vrot.slane %v768, %v780
    %785 = vmatprep.subr.mxu0 %v720
    %786 = vmatpush1.msra.mxu0 %v719
    %787 = vmatprep.subr.mxu0 %v723
    %788 = vmatpush1.msra.mxu0 %v722
    %789 = vmatprep.subr.mxu0 %v726
    %790 = vmatpush1.msra.mxu0 %v725
    %791 = vmatprep.subr.mxu0 %v729
    %792 = vmatpush1.msra.mxu0 %v728
    %793 = vmatprep.subr.mxu0 %v732
    %794 = vmatpush1.msra.mxu0 %v731
    %795 = vmatprep.subr.mxu0 %v735
    %796 = vmatpush1.msra.mxu0 %v734
    %797 = vmatprep.subr.mxu0 %v738
    %798 = vmatpush1.msra.mxu0 %v737
    %799 = vmatprep.subr.mxu0 %v741
    %800 = vmatpush1.msra.mxu0 %v740
    %801 = vmatprep.subr.mxu0 %v744
    %802 = vmatpush1.msra.mxu0 %v743
    %803 = vmatprep.subr.mxu0 %v747
    %804 = vmatpush1.msra.mxu0 %v746
    %805 = vmatprep.subr.mxu0 %v750
    %806 = vmatpush1.msra.mxu0 %v749
    %807 = vmatprep.subr.mxu0 %v753
    %808 = vmatpush1.msra.mxu0 %v752
    %809 = vmatprep.subr.mxu0 %v756
    %810 = vmatpush1.msra.mxu0 %v755
    %811 = vmatprep.subr.mxu0 %v759
    %812 = vmatpush1.msra.mxu0 %v758
    %813 = vmatprep.subr.mxu0 %v762
    %814 = vmatpush1.msra.mxu0 %v761
    %815 = vmatprep.subr.mxu0 %v765
    %816 = vmatpush1.msra.mxu0 %v764
    %817 = vmatprep.subr.mxu0 0.0
    %818 = vmatpush1.msra.mxu0 0.0
    %819 = vmatprep.subr.mxu0 0.0
    %820 = vmatpush1.msra.mxu0 0.0
    %821 = vmatprep.subr.mxu0 0.0
    %822 = vmatpush1.msra.mxu0 0.0
    %823 = vmatprep.subr.mxu0 0.0
    %824 = vmatpush1.msra.mxu0 0.0
    %825 = vmatprep.subr.mxu0 0.0
    %826 = vmatpush1.msra.mxu0 0.0
    %827 = vmatprep.subr.mxu0 0.0
    %828 = vmatpush1.msra.mxu0 0.0
    %829 = vmatprep.subr.mxu0 0.0
    %830 = vmatpush1.msra.mxu0 0.0
    %831 = vmatprep.subr.mxu0 0.0
    %832 = vmatpush1.msra.mxu0 0.0
    %833 = vmatprep.subr.mxu0 0.0
    %834 = vmatpush1.msra.mxu0 0.0
    %835 = vmatprep.subr.mxu0 0.0
    %836 = vmatpush1.msra.mxu0 0.0
    %837 = vmatprep.subr.mxu0 0.0
    %838 = vmatpush1.msra.mxu0 0.0
    %839 = vmatprep.subr.mxu0 0.0
    %840 = vmatpush1.msra.mxu0 0.0
    %841 = vmatprep.subr.mxu0 0.0
    %842 = vmatpush1.msra.mxu0 0.0
    %843 = vmatprep.subr.mxu0 0.0
    %844 = vmatpush1.msra.mxu0 0.0
    %845 = vmatprep.subr.mxu0 0.0
    %846 = vmatpush1.msra.mxu0 0.0
    %847 = vmatprep.subr.mxu0 0.0
    %848 = vmatpush1.msra.mxu0 0.0
    %849 = vmatprep.mubr.f32.mxu0 0.0
    %850 = vmatmul.mubr.f32.gmra.mrb[0].mxu0 %v706
    %v851 = vpop.f32.mrb[0].mxu0
    %v852 = vadd.f32 %v773, %v851
    %v853 = vpop.f32.mrb[0].mxu0
    %v854 = vadd.f32 %v777, %v853
    %855 = vmatprep.mubr.f32.mxu0 0.0
    %856 = vmatmul.mubr.f32.gmra.mrb[0].mxu0 %v707
    %v857 = vpop.f32.mrb[0].mxu0
    %v858 = vadd.f32 %v773, %v857
    %v859 = vpop.f32.mrb[0].mxu0
    %v860 = vadd.f32 %v777, %v859
    %861 = vmatprep.mubr.f32.mxu0 0.0
    %862 = vmatmul.mubr.f32.gmra.mrb[0].mxu0 %v708
    %v863 = vpop.f32.mrb[0].mxu0
    %v864 = vadd.f32 %v773, %v863
    %v865 = vpop.f32.mrb[0].mxu0
    %v866 = vadd.f32 %v777, %v865
    %867 = vmatprep.mubr.f32.mxu0 0.0
    %868 = vmatmul.mubr.f32.gmra.mrb[0].mxu0 %v709
    %v869 = vpop.f32.mrb[0].mxu0
    %v870 = vadd.f32 %v773, %v869
    %v871 = vpop.f32.mrb[0].mxu0
    %v872 = vadd.f32 %v777, %v871
    %873 = vmatprep.mubr.f32.mxu0 0.0
    %874 = vmatmul.mubr.f32.gmra.mrb[0].mxu0 %v710
    %v875 = vpop.f32.mrb[0].mxu0
    %v876 = vadd.f32 %v773, %v875
    %v877 = vpop.f32.mrb[0].mxu0
    %v878 = vadd.f32 %v777, %v877
    %879 = vmatprep.mubr.f32.mxu0 0.0
    %880 = vmatmul.mubr.f32.gmra.mrb[0].mxu0 %v711
    %v881 = vpop.f32.mrb[0].mxu0
    %v882 = vadd.f32 %v773, %v881
    %v883 = vpop.f32.mrb[0].mxu0
    %v884 = vadd.f32 %v777, %v883
    %885 = vmatprep.mubr.f32.mxu0 0.0
    %886 = vmatmul.mubr.f32.gmra.mrb[0].mxu0 %v712
    %v887 = vpop.f32.mrb[0].mxu0
    %v888 = vadd.f32 %v773, %v887
    %v889 = vpop.f32.mrb[0].mxu0
    %v890 = vadd.f32 %v777, %v889
    %891 = vmatprep.mubr.f32.mxu0 0.0
    %892 = vmatmul.mubr.f32.gmra.mrb[0].mxu0 %v713
    %v893 = vpop.f32.mrb[0].mxu0
    %v894 = vadd.f32 %v773, %v893
    %v895 = vpop.f32.mrb[0].mxu0
    %v896 = vadd.f32 %v777, %v895
    %897 = vmatprep.mubr.f32.mxu0 0.0
    %898 = vmatmul.mubr.f32.gmra.mrb[0].mxu0 %v714
    %v899 = vpop.f32.mrb[0].mxu0
    %v900 = vadd.f32 %v773, %v899
    %v901 = vpop.f32.mrb[0].mxu0
    %v902 = vadd.f32 %v777, %v901
    %903 = vmatprep.mubr.f32.mxu0 0.0
    %904 = vmatmul.mubr.f32.gmra.mrb[0].mxu0 %v715
    %v905 = vpop.f32.mrb[0].mxu0
    %v906 = vadd.f32 %v773, %v905
    %v907 = vpop.f32.mrb[0].mxu0
    %v908 = vadd.f32 %v777, %v907
    %909 = vmatprep.mubr.f32.mxu0 0.0
    %910 = vmatmul.mubr.f32.gmra.mrb[0].mxu0 %v716
    %v911 = vpop.f32.mrb[0].mxu0
    %v912 = vadd.f32 %v773, %v911
    %v913 = vpop.f32.mrb[0].mxu0
    %v914 = vadd.f32 %v777, %v913
    %915 = vmatprep.mubr.f32.mxu0 0.0
    %916 = vmatmul.mubr.f32.gmra.mrb[0].mxu0 %v717
    %v917 = vpop.f32.mrb[0].mxu0
    %v918 = vadd.f32 %v773, %v917
    %v919 = vpop.f32.mrb[0].mxu0
    %v920 = vadd.f32 %v777, %v919
    %921 = vdwg.mxu0
    %922 = vmatprep.subr.mxu0 0.0
    %923 = vmatpush1.msra.mxu0 %v721
    %924 = vmatprep.subr.mxu0 0.0
    %925 = vmatpush1.msra.mxu0 %v724
    %926 = vmatprep.subr.mxu0 0.0
    %927 = vmatpush1.msra.mxu0 %v727
    %928 = vmatprep.subr.mxu0 0.0
    %929 = vmatpush1.msra.mxu0 %v730
    %930 = vmatprep.subr.mxu0 0.0
    %931 = vmatpush1.msra.mxu0 %v733
    %932 = vmatprep.subr.mxu0 0.0
    %933 = vmatpush1.msra.mxu0 %v736
    %934 = vmatprep.subr.mxu0 0.0
    %935 = vmatpush1.msra.mxu0 %v739
    %936 = vmatprep.subr.mxu0 0.0
    %937 = vmatpush1.msra.mxu0 %v742
    %938 = vmatprep.subr.mxu0 0.0
    %939 = vmatpush1.msra.mxu0 %v745
    %940 = vmatprep.subr.mxu0 0.0
    %941 = vmatpush1.msra.mxu0 %v748
    %942 = vmatprep.subr.mxu0 0.0
    %943 = vmatpush1.msra.mxu0 %v751
    %944 = vmatprep.subr.mxu0 0.0
    %945 = vmatpush1.msra.mxu0 %v754
    %946 = vmatprep.subr.mxu0 0.0
    %947 = vmatpush1.msra.mxu0 %v757
    %948 = vmatprep.subr.mxu0 0.0
    %949 = vmatpush1.msra.mxu0 %v760
    %950 = vmatprep.subr.mxu0 0.0
    %951 = vmatpush1.msra.mxu0 %v763
    %952 = vmatprep.subr.mxu0 0.0
    %953 = vmatpush1.msra.mxu0 %v766
    %954 = vmatprep.subr.mxu0 0.0
    %955 = vmatpush1.msra.mxu0 0.0
    %956 = vmatprep.subr.mxu0 0.0
    %957 = vmatpush1.msra.mxu0 0.0
    %958 = vmatprep.subr.mxu0 0.0
    %959 = vmatpush1.msra.mxu0 0.0
    %960 = vmatprep.subr.mxu0 0.0
    %961 = vmatpush1.msra.mxu0 0.0
    %962 = vmatprep.subr.mxu0 0.0
    %963 = vmatpush1.msra.mxu0 0.0
    %964 = vmatprep.subr.mxu0 0.0
    %965 = vmatpush1.msra.mxu0 0.0
    %966 = vmatprep.subr.mxu0 0.0
    %967 = vmatpush1.msra.mxu0 0.0
    %968 = vmatprep.subr.mxu0 0.0
    %969 = vmatpush1.msra.mxu0 0.0
    %970 = vmatprep.subr.mxu0 0.0
    %971 = vmatpush1.msra.mxu0 0.0
    %972 = vmatprep.subr.mxu0 0.0
    %973 = vmatpush1.msra.mxu0 0.0
    %974 = vmatprep.subr.mxu0 0.0
    %975 = vmatpush1.msra.mxu0 0.0
    %976 = vmatprep.subr.mxu0 0.0
    %977 = vmatpush1.msra.mxu0 0.0
    %978 = vmatprep.subr.mxu0 0.0
    %979 = vmatpush1.msra.mxu0 0.0
    %980 = vmatprep.subr.mxu0 0.0
    %981 = vmatpush1.msra.mxu0 0.0
    %982 = vmatprep.subr.mxu0 0.0
    %983 = vmatpush1.msra.mxu0 0.0
    %984 = vmatprep.subr.mxu0 0.0
    %985 = vmatpush1.msra.mxu0 0.0
    %986 = vmatprep.mubr.f32.mxu0 0.0
    %987 = vmatmul.mubr.f32.gmra.mrb[0].mxu0 %v706
    %v988 = vpop.f32.mrb[0].mxu0
    %v989 = vadd.f32 %v781, %v988
    %v990 = vpop.f32.mrb[0].mxu0
    %991 = vmatprep.mubr.f32.mxu0 0.0
    %992 = vmatmul.mubr.f32.gmra.mrb[0].mxu0 %v707
    %v993 = vpop.f32.mrb[0].mxu0
    %v994 = vadd.f32 %v781, %v993
    %v995 = vpop.f32.mrb[0].mxu0
    %996 = vmatprep.mubr.f32.mxu0 0.0
    %997 = vmatmul.mubr.f32.gmra.mrb[0].mxu0 %v708
    %v998 = vpop.f32.mrb[0].mxu0
    %v999 = vadd.f32 %v781, %v998
    %v1000 = vpop.f32.mrb[0].mxu0
    %1001 = vmatprep.mubr.f32.mxu0 0.0
    %1002 = vmatmul.mubr.f32.gmra.mrb[0].mxu0 %v709
    %v1003 = vpop.f32.mrb[0].mxu0
    %v1004 = vadd.f32 %v781, %v1003
    %v1005 = vpop.f32.mrb[0].mxu0
    %1006 = vmatprep.mubr.f32.mxu0 0.0
    %1007 = vmatmul.mubr.f32.gmra.mrb[0].mxu0 %v710
    %v1008 = vpop.f32.mrb[0].mxu0
    %v1009 = vadd.f32 %v781, %v1008
    %v1010 = vpop.f32.mrb[0].mxu0
    %1011 = vmatprep.mubr.f32.mxu0 0.0
    %1012 = vmatmul.mubr.f32.gmra.mrb[0].mxu0 %v711
    %v1013 = vpop.f32.mrb[0].mxu0
    %v1014 = vadd.f32 %v781, %v1013
    %v1015 = vpop.f32.mrb[0].mxu0
    %1016 = vmatprep.mubr.f32.mxu0 0.0
    %1017 = vmatmul.mubr.f32.gmra.mrb[0].mxu0 %v712
    %v1018 = vpop.f32.mrb[0].mxu0
    %v1019 = vadd.f32 %v781, %v1018
    %v1020 = vpop.f32.mrb[0].mxu0
    %1021 = vmatprep.mubr.f32.mxu0 0.0
    %1022 = vmatmul.mubr.f32.gmra.mrb[0].mxu0 %v713
    %v1023 = vpop.f32.mrb[0].mxu0
    %v1024 = vadd.f32 %v781, %v1023
    %v1025 = vpop.f32.mrb[0].mxu0
    %1026 = vmatprep.mubr.f32.mxu0 0.0
    %1027 = vmatmul.mubr.f32.gmra.mrb[0].mxu0 %v714
    %v1028 = vpop.f32.mrb[0].mxu0
    %v1029 = vadd.f32 %v781, %v1028
    %v1030 = vpop.f32.mrb[0].mxu0
    %1031 = vmatprep.mubr.f32.mxu0 0.0
    %1032 = vmatmul.mubr.f32.gmra.mrb[0].mxu0 %v715
    %v1033 = vpop.f32.mrb[0].mxu0
    %v1034 = vadd.f32 %v781, %v1033
    %v1035 = vpop.f32.mrb[0].mxu0
    %1036 = vmatprep.mubr.f32.mxu0 0.0
    %1037 = vmatmul.mubr.f32.gmra.mrb[0].mxu0 %v716
    %v1038 = vpop.f32.mrb[0].mxu0
    %v1039 = vadd.f32 %v781, %v1038
    %v1040 = vpop.f32.mrb[0].mxu0
    %1041 = vmatprep.mubr.f32.mxu0 0.0
    %1042 = vmatmul.mubr.f32.gmra.mrb[0].mxu0 %v717
    %v1043 = vpop.f32.mrb[0].mxu0
    %v1044 = vadd.f32 %v781, %v1043
    %v1045 = vpop.f32.mrb[0].mxu0
    %1046 = vdwg.mxu0
    %1047 = vst [vmem:[#allocation3] sm:$0xff] %v852
    %1048 = vst [vmem:[#allocation3 + $0x8] sm:$0xff] %v854
    %1049 = vst [vmem:[#allocation3 + $0x10] sm:$0xff] %v989
    %1050 = vst [vmem:[#allocation3 + $0x18] sm:$0xff] %v858
    %1051 = vst [vmem:[#allocation3 + $0x20] sm:$0xff] %v860
    %1052 = vst [vmem:[#allocation3 + $0x28] sm:$0xff] %v994
    %1053 = vst [vmem:[#allocation3 + $0x30] sm:$0xff] %v864
    %1054 = vst [vmem:[#allocation3 + $0x38] sm:$0xff] %v866
    %1055 = vst [vmem:[#allocation3 + $0x40] sm:$0xff] %v999
    %1056 = vst [vmem:[#allocation3 + $0x48] sm:$0xff] %v870
    %1057 = vst [vmem:[#allocation3 + $0x50] sm:$0xff] %v872
    %1058 = vst [vmem:[#allocation3 + $0x58] sm:$0xff] %v1004
    %1059 = vst [vmem:[#allocation3 + $0x60] sm:$0xff] %v876
    %1060 = vst [vmem:[#allocation3 + $0x68] sm:$0xff] %v878
    %1061 = vst [vmem:[#allocation3 + $0x70] sm:$0xff] %v1009
    %1062 = vst [vmem:[#allocation3 + $0x78] sm:$0xff] %v882
    %1063 = vst [vmem:[#allocation3 + $0x80] sm:$0xff] %v884
    %1064 = vst [vmem:[#allocation3 + $0x88] sm:$0xff] %v1014
    %1065 = vst [vmem:[#allocation3 + $0x90] sm:$0xff] %v888
    %1066 = vst [vmem:[#allocation3 + $0x98] sm:$0xff] %v890
    %1067 = vst [vmem:[#allocation3 + $0xa0] sm:$0xff] %v1019
    %1068 = vst [vmem:[#allocation3 + $0xa8] sm:$0xff] %v894
    %1069 = vst [vmem:[#allocation3 + $0xb0] sm:$0xff] %v896
    %1070 = vst [vmem:[#allocation3 + $0xb8] sm:$0xff] %v1024
    %1071 = vst [vmem:[#allocation3 + $0xc0] sm:$0xff] %v900
    %1072 = vst [vmem:[#allocation3 + $0xc8] sm:$0xff] %v902
    %1073 = vst [vmem:[#allocation3 + $0xd0] sm:$0xff] %v1029
    %1074 = vst [vmem:[#allocation3 + $0xd8] sm:$0xff] %v906
    %1075 = vst [vmem:[#allocation3 + $0xe0] sm:$0xff] %v908
    %1076 = vst [vmem:[#allocation3 + $0xe8] sm:$0xff] %v1034
    %1077 = vst [vmem:[#allocation3 + $0xf0] sm:$0xff] %v912
    %1078 = vst [vmem:[#allocation3 + $0xf8] sm:$0xff] %v914
    %1079 = vst [vmem:[#allocation3 + $0x100] sm:$0xff] %v1039
    %1080 = vst [vmem:[#allocation3 + $0x108] sm:$0xff] %v918
    %1081 = vst [vmem:[#allocation3 + $0x110] sm:$0xff] %v920
    %1082 = vst [vmem:[#allocation3 + $0x118] sm:$0xff] %v1044
    %s1083 = scalar_lea.vmem [#allocation2], 8
    %v1084 = vld [vmem:[%s1083] sm:$0xff]
    loop: start=0, step=1, limit=12
    $region57: #{tpu_custom_call.1} parent=1 // loop_pre_header
      _
    $region58: #{tpu_custom_call.1} parent=1 // loop_header
      %s1086 = sphi 0, %s1090
      %p1087 = scmp.ge.s32.totalorder %s1086, 12
      %v1091 = vphi %v1084, %v1309
    $region59: #{tpu_custom_call.1} parent=1 // loop_header_branch
      %1089 = sbr.rel (%p1087) target = $region63
    $region60: #{tpu_custom_call.1} parent=1 // loop_body
      %s1092 = smul.u32 %s1086, 3
      %s1093 = smul.addr %s1092, 8
      %s1094 = scalar_lea.vmem [#allocation3], %s1093
      %v1095 = vld [vmem:[%s1094] sm:$0xff]
      %v1096 = vld [vmem:[%s1094 + $0x8] sm:$0xff]
      %v1097 = vld [vmem:[%s1094 + $0x10] sm:$0xff]
      %s1098 = scalar_lea.vmem [#allocation11], 256
      %v1099 = vld [vmem:[%s1098] sm:$0xff]
      %v1100 = vld [vmem:[%s1098 + $0x8] sm:$0xff]
      %v1101 = vld [vmem:[%s1098 + $0x10] sm:$0xff]
      %v1102 = vld [vmem:[%s1098 + $0x18] sm:$0xff]
      %v1103 = vld [vmem:[%s1098 + $0x20] sm:$0xff]
      %v1104 = vld [vmem:[%s1098 + $0x28] sm:$0xff]
      %v1105 = vld [vmem:[%s1098 + $0x30] sm:$0xff]
      %v1106 = vld [vmem:[%s1098 + $0x38] sm:$0xff]
      %v1107 = vld [vmem:[%s1098 + $0x40] sm:$0xff]
      %v1108 = vld [vmem:[%s1098 + $0x48] sm:$0xff]
      %v1109 = vld [vmem:[%s1098 + $0x50] sm:$0xff]
      %v1110 = vld [vmem:[%s1098 + $0x58] sm:$0xff]
      %v1111 = vld [vmem:[%s1098 + $0x60] sm:$0xff]
      %v1112 = vld [vmem:[%s1098 + $0x68] sm:$0xff]
      %v1113 = vld [vmem:[%s1098 + $0x70] sm:$0xff]
      %v1114 = vld [vmem:[%s1098 + $0x78] sm:$0xff]
      %v1115 = vld [vmem:[%s1098 + $0x80] sm:$0xff]
      %v1116 = vld [vmem:[%s1098 + $0x88] sm:$0xff]
      %v1117 = vld [vmem:[%s1098 + $0x90] sm:$0xff]
      %v1118 = vld [vmem:[%s1098 + $0x98] sm:$0xff]
      %v1119 = vld [vmem:[%s1098 + $0xa0] sm:$0xff]
      %v1120 = vld [vmem:[%s1098 + $0xa8] sm:$0xff]
      %v1121 = vld [vmem:[%s1098 + $0xb0] sm:$0xff]
      %v1122 = vld [vmem:[%s1098 + $0xb8] sm:$0xff]
      %v1123 = vld [vmem:[%s1098 + $0xc0] sm:$0xff]
      %v1124 = vld [vmem:[%s1098 + $0xc8] sm:$0xff]
      %v1125 = vld [vmem:[%s1098 + $0xd0] sm:$0xff]
      %v1126 = vld [vmem:[%s1098 + $0xd8] sm:$0xff]
      %v1127 = vld [vmem:[%s1098 + $0xe0] sm:$0xff]
      %v1128 = vld [vmem:[%s1098 + $0xe8] sm:$0xff]
      %v1129 = vld [vmem:[%s1098 + $0xf0] sm:$0xff]
      %v1130 = vld [vmem:[%s1098 + $0xf8] sm:$0xff]
      %1131 = vmatprep.subr.mxu0 %v1100
      %1132 = vmatpush1.msra.mxu0 %v1099
      %1133 = vmatprep.subr.mxu0 %v1102
      %1134 = vmatpush1.msra.mxu0 %v1101
      %1135 = vmatprep.subr.mxu0 %v1104
      %1136 = vmatpush1.msra.mxu0 %v1103
      %1137 = vmatprep.subr.mxu0 %v1106
      %1138 = vmatpush1.msra.mxu0 %v1105
      %1139 = vmatprep.subr.mxu0 %v1108
      %1140 = vmatpush1.msra.mxu0 %v1107
      %1141 = vmatprep.subr.mxu0 %v1110
      %1142 = vmatpush1.msra.mxu0 %v1109
      %1143 = vmatprep.subr.mxu0 %v1112
      %1144 = vmatpush1.msra.mxu0 %v1111
      %1145 = vmatprep.subr.mxu0 %v1114
      %1146 = vmatpush1.msra.mxu0 %v1113
      %1147 = vmatprep.subr.mxu0 %v1116
      %1148 = vmatpush1.msra.mxu0 %v1115
      %1149 = vmatprep.subr.mxu0 %v1118
      %1150 = vmatpush1.msra.mxu0 %v1117
      %1151 = vmatprep.subr.mxu0 %v1120
      %1152 = vmatpush1.msra.mxu0 %v1119
      %1153 = vmatprep.subr.mxu0 %v1122
      %1154 = vmatpush1.msra.mxu0 %v1121
      %1155 = vmatprep.subr.mxu0 %v1124
      %1156 = vmatpush1.msra.mxu0 %v1123
      %1157 = vmatprep.subr.mxu0 %v1126
      %1158 = vmatpush1.msra.mxu0 %v1125
      %1159 = vmatprep.subr.mxu0 %v1128
      %1160 = vmatpush1.msra.mxu0 %v1127
      %1161 = vmatprep.subr.mxu0 %v1130
      %1162 = vmatpush1.msra.mxu0 %v1129
      %1163 = vmatprep.subr.mxu0 0.0
      %1164 = vmatpush1.msra.mxu0 0.0
      %1165 = vmatprep.subr.mxu0 0.0
      %1166 = vmatpush1.msra.mxu0 0.0
      %1167 = vmatprep.subr.mxu0 0.0
      %1168 = vmatpush1.msra.mxu0 0.0
      %1169 = vmatprep.subr.mxu0 0.0
      %1170 = vmatpush1.msra.mxu0 0.0
      %1171 = vmatprep.subr.mxu0 0.0
      %1172 = vmatpush1.msra.mxu0 0.0
      %1173 = vmatprep.subr.mxu0 0.0
      %1174 = vmatpush1.msra.mxu0 0.0
      %1175 = vmatprep.subr.mxu0 0.0
      %1176 = vmatpush1.msra.mxu0 0.0
      %1177 = vmatprep.subr.mxu0 0.0
      %1178 = vmatpush1.msra.mxu0 0.0
      %1179 = vmatprep.subr.mxu0 0.0
      %1180 = vmatpush1.msra.mxu0 0.0
      %1181 = vmatprep.subr.mxu0 0.0
      %1182 = vmatpush1.msra.mxu0 0.0
      %1183 = vmatprep.subr.mxu0 0.0
      %1184 = vmatpush1.msra.mxu0 0.0
      %1185 = vmatprep.subr.mxu0 0.0
      %1186 = vmatpush1.msra.mxu0 0.0
      %1187 = vmatprep.subr.mxu0 0.0
      %1188 = vmatpush1.msra.mxu0 0.0
      %1189 = vmatprep.subr.mxu0 0.0
      %1190 = vmatpush1.msra.mxu0 0.0
      %1191 = vmatprep.subr.mxu0 0.0
      %1192 = vmatpush1.msra.mxu0 0.0
      %1193 = vmatprep.subr.mxu0 0.0
      %1194 = vmatpush1.msra.mxu0 0.0
      %1195 = vmatprep.mubr.f32.mxu0 0.0
      %1196 = vmatmul.mubr.f32.gmra.mrb[0].mxu0 %v1091
      %v1197 = vpop.f32.mrb[0].mxu0
      %v1198 = vadd.f32 0.0, %v1197
      %v1199 = vpop.f32.mrb[0].mxu0
      %v1200 = vadd.f32 0.0, %v1199
      %1201 = vdwg.mxu0
      %v1202 = vadd.f32 %v1095, %v1198
      %v1203 = vxor.u32 %v1202, 2147483648
      %v1204 = vmul.f32 %v1203, 1.442695
      %v1205 = vpow.pop %v1204
      %v1206 = vadd.f32 %v1205, 1.0
      %v1207 = vrcp.pop %v1206
      %v1208 = vmul.f32 1.0, %v1207
      %v1209 = vadd.f32 %v1096, %v1200
      %v1210 = vxor.u32 %v1209, 2147483648
      %v1211 = vmul.f32 %v1210, 1.442695
      %v1212 = vpow.pop %v1211
      %v1213 = vadd.f32 %v1212, 1.0
      %v1214 = vrcp.pop %v1213
      %v1215 = vmul.f32 1.0, %v1214
      %v1216 = vmul.f32 %v1215, %v1091
      %s1217 = scalar_lea.vmem [#allocation13], 128
      %v1218 = vld [vmem:[%s1217] sm:$0xff]
      %v1219 = vld [vmem:[%s1217 + $0x8] sm:$0xff]
      %v1220 = vld [vmem:[%s1217 + $0x10] sm:$0xff]
      %v1221 = vld [vmem:[%s1217 + $0x18] sm:$0xff]
      %v1222 = vld [vmem:[%s1217 + $0x20] sm:$0xff]
      %v1223 = vld [vmem:[%s1217 + $0x28] sm:$0xff]
      %v1224 = vld [vmem:[%s1217 + $0x30] sm:$0xff]
      %v1225 = vld [vmem:[%s1217 + $0x38] sm:$0xff]
      %v1226 = vld [vmem:[%s1217 + $0x40] sm:$0xff]
      %v1227 = vld [vmem:[%s1217 + $0x48] sm:$0xff]
      %v1228 = vld [vmem:[%s1217 + $0x50] sm:$0xff]
      %v1229 = vld [vmem:[%s1217 + $0x58] sm:$0xff]
      %v1230 = vld [vmem:[%s1217 + $0x60] sm:$0xff]
      %v1231 = vld [vmem:[%s1217 + $0x68] sm:$0xff]
      %v1232 = vld [vmem:[%s1217 + $0x70] sm:$0xff]
      %v1233 = vld [vmem:[%s1217 + $0x78] sm:$0xff]
      %1234 = vmatprep.subr.mxu0 0.0
      %1235 = vmatpush1.msra.mxu0 %v1218
      %1236 = vmatprep.subr.mxu0 0.0
      %1237 = vmatpush1.msra.mxu0 %v1219
      %1238 = vmatprep.subr.mxu0 0.0
      %1239 = vmatpush1.msra.mxu0 %v1220
      %1240 = vmatprep.subr.mxu0 0.0
      %1241 = vmatpush1.msra.mxu0 %v1221
      %1242 = vmatprep.subr.mxu0 0.0
      %1243 = vmatpush1.msra.mxu0 %v1222
      %1244 = vmatprep.subr.mxu0 0.0
      %1245 = vmatpush1.msra.mxu0 %v1223
      %1246 = vmatprep.subr.mxu0 0.0
      %1247 = vmatpush1.msra.mxu0 %v1224
      %1248 = vmatprep.subr.mxu0 0.0
      %1249 = vmatpush1.msra.mxu0 %v1225
      %1250 = vmatprep.subr.mxu0 0.0
      %1251 = vmatpush1.msra.mxu0 %v1226
      %1252 = vmatprep.subr.mxu0 0.0
      %1253 = vmatpush1.msra.mxu0 %v1227
      %1254 = vmatprep.subr.mxu0 0.0
      %1255 = vmatpush1.msra.mxu0 %v1228
      %1256 = vmatprep.subr.mxu0 0.0
      %1257 = vmatpush1.msra.mxu0 %v1229
      %1258 = vmatprep.subr.mxu0 0.0
      %1259 = vmatpush1.msra.mxu0 %v1230
      %1260 = vmatprep.subr.mxu0 0.0
      %1261 = vmatpush1.msra.mxu0 %v1231
      %1262 = vmatprep.subr.mxu0 0.0
      %1263 = vmatpush1.msra.mxu0 %v1232
      %1264 = vmatprep.subr.mxu0 0.0
      %1265 = vmatpush1.msra.mxu0 %v1233
      %1266 = vmatprep.subr.mxu0 0.0
      %1267 = vmatpush1.msra.mxu0 0.0
      %1268 = vmatprep.subr.mxu0 0.0
      %1269 = vmatpush1.msra.mxu0 0.0
      %1270 = vmatprep.subr.mxu0 0.0
      %1271 = vmatpush1.msra.mxu0 0.0
      %1272 = vmatprep.subr.mxu0 0.0
      %1273 = vmatpush1.msra.mxu0 0.0
      %1274 = vmatprep.subr.mxu0 0.0
      %1275 = vmatpush1.msra.mxu0 0.0
      %1276 = vmatprep.subr.mxu0 0.0
      %1277 = vmatpush1.msra.mxu0 0.0
      %1278 = vmatprep.subr.mxu0 0.0
      %1279 = vmatpush1.msra.mxu0 0.0
      %1280 = vmatprep.subr.mxu0 0.0
      %1281 = vmatpush1.msra.mxu0 0.0
      %1282 = vmatprep.subr.mxu0 0.0
      %1283 = vmatpush1.msra.mxu0 0.0
      %1284 = vmatprep.subr.mxu0 0.0
      %1285 = vmatpush1.msra.mxu0 0.0
      %1286 = vmatprep.subr.mxu0 0.0
      %1287 = vmatpush1.msra.mxu0 0.0
      %1288 = vmatprep.subr.mxu0 0.0
      %1289 = vmatpush1.msra.mxu0 0.0
      %1290 = vmatprep.subr.mxu0 0.0
      %1291 = vmatpush1.msra.mxu0 0.0
      %1292 = vmatprep.subr.mxu0 0.0
      %1293 = vmatpush1.msra.mxu0 0.0
      %1294 = vmatprep.subr.mxu0 0.0
      %1295 = vmatpush1.msra.mxu0 0.0
      %1296 = vmatprep.subr.mxu0 0.0
      %1297 = vmatpush1.msra.mxu0 0.0
      %1298 = vmatprep.mubr.f32.mxu0 0.0
      %1299 = vmatmul.mubr.f32.gmra.mrb[0].mxu0 %v1216
      %v1300 = vpop.f32.mrb[0].mxu0
      %v1301 = vadd.f32 0.0, %v1300
      %v1302 = vpop.f32.mrb[0].mxu0
      %1303 = vdwg.mxu0
      %v1304 = vadd.f32 %v1097, %v1301
      %v1305 = vtanh.pop %v1304
      %v1306 = vsub.f32 1.0, %v1208
      %v1307 = vmul.f32 %v1306, %v1305
      %v1308 = vmul.f32 %v1208, %v1091
      %v1309 = vadd.f32 %v1307, %v1308
      %s1310 = smul.u32 %s1086, 8
      %s1311 = scalar_lea.vmem [#allocation14], %s1310
      %1312 = vst [vmem:[%s1311] sm:$0xff] %v1309
    $region61: #{tpu_custom_call.1} parent=1 // loop_footer
      %s1090 = sadd.s32 1, %s1086
    $region62: #{tpu_custom_call.1} parent=1 // loop_footer_branch
      %1085 = sbr.rel target = $region58
    $region63: #{tpu_custom_call.1} parent=1 // loop_exit
      _
    %1313 = vst [vmem:[%s1083] sm:$0xff] %v1091
    // Predicated region
    $region64: #{tpu_custom_call.1} parent=1 // pred_check
      %p1314 = pneg %p95
    $region65: #{tpu_custom_call.1} parent=1 // pred_check_branch
      %1316 = sbr.rel (%p1314) target = $region67
    $region66: #{tpu_custom_call.1} parent=1 // pred_region
      %v1317 = vld [vmem:[#allocation2] sm:$0xff]
      %v1318 = vld [vmem:[#allocation2 + $0x8] sm:$0xff]
      %1319 = vst [vmem:[#allocation15] sm:$0xff] %v1317
      %1320 = vst [vmem:[#allocation15 + $0x8] sm:$0xff] %v1318
    $region67: #{tpu_custom_call.1} parent=1 // pred_fallthru
      _
    // Predicated region
    $region68: #{tpu_custom_call.1} parent=1 // pred_check
      _
    $region69: #{tpu_custom_call.1} parent=1 // pred_check_branch
      %1322 = sbr.rel (0) target = $region71
    $region70: #{tpu_custom_call.1} parent=1 // pred_region
      %s1324 = ssub.s32 1536, 1536
      %1325 = vsyncadd [#allocation7], %s1324
      %s1326 = sshll.u32 [#allocation14], 4
      %s1327 = int_to_ptr.vmem [resolvable:$true] %s1326
      %1332 = dma.vmem_to_hbm [thread:$0]  %s1327, 1536, %s6, [#allocation7], 128, 128, 8
    $region71: #{tpu_custom_call.1} parent=1 // pred_fallthru
      _
    // Predicated region
    $region72: #{tpu_custom_call.1} parent=1 // pred_check
      _
    $region73: #{tpu_custom_call.1} parent=1 // pred_check_branch
      %1334 = sbr.rel (0) target = $region75
    $region74: #{tpu_custom_call.1} parent=1 // pred_region
      %s1336 = ssub.s32 256, 256
      %1337 = vsyncadd [#allocation16], %s1336
      %s1338 = sshll.u32 [#allocation15], 4
      %s1339 = int_to_ptr.vmem [resolvable:$true] %s1338
      %1344 = dma.vmem_to_hbm [thread:$0]  %s1339, 256, %s7, [#allocation16], 128, 128, 8
    $region75: #{tpu_custom_call.1} parent=1 // pred_fallthru
      _
    // Predicated region
    $region76: #{tpu_custom_call.1} parent=1 // pred_check
      _
    $region77: #{tpu_custom_call.1} parent=1 // pred_check_branch
      %1346 = sbr.rel (0) target = $region79
    $region78: #{tpu_custom_call.1} parent=1 // pred_region
      %1347 = dma.done [#allocation7], 1536
    $region79: #{tpu_custom_call.1} parent=1 // pred_fallthru
      _
    // Predicated region
    $region80: #{tpu_custom_call.1} parent=1 // pred_check
      _
    $region81: #{tpu_custom_call.1} parent=1 // pred_check_branch
      %1349 = sbr.rel (0) target = $region83
    $region82: #{tpu_custom_call.1} parent=1 // pred_region
      %1350 = dma.done [#allocation16], 256
    $region83: #{tpu_custom_call.1} parent=1 // pred_fallthru
      _
    %1351 = vsyncpa [#allocation6], 1
    %1352 = vsyncpa [#allocation9], 1
    %1353 = vsyncpa [#allocation12], 1
    %1354 = vsyncpa [#allocation7], 1
    %1355 = vsyncpa [#allocation16], 1

</llo_original>
